<compile_context>
chip_gen: v7x
topology: tpu7x:2x2x1
jax: 0.10.0
libtpu: 0.0.40
codegen_flags: <defaults>
</compile_context>

<pallas_src>
import numpy as np
import jax
import jax.numpy as jnp
from jax.experimental import pallas as pl
from jax.experimental.pallas import tpu as pltpu


# ----------------------------------------------------------------------------- Pallas kernel

def _encoder_conv_kernel(xp_ref, w1_ref, b1_ref, w2_ref, b2_ref,
                         w3_ref, b3_ref, w4_ref, b4_ref, o_ref):
    """One batch-block.  xp_ref is (4, B_blk, L4p, C_in), phase-major polyphase layout with
    xp[p, b, s] == x[b, t = 4*s + p].  Rows of every matmul are the merged (b, s) index, so the
    whole block is a handful of large MXU calls."""
    P, B, S, C = xp_ref.shape
    R = B * S                                         # merged (batch, phase-time) rows

    def mm(a, w):                                     # bf16 MXU inputs, f32 accumulation
        return jnp.dot(a, w, preferred_element_type=jnp.float32)

    def shift_up(a):                                  # out[r] = a[r+1]; last row is don't-care
        return jnp.concatenate([a[1:], a[:1]], axis=0)

    # ---- conv1 (1x1) + ReLU: all phases / batches in one matmul (M = 4*R) ------------------
    x = xp_ref[...].reshape(P * R, C)
    y1 = jnp.maximum(mm(x, w1_ref[...]) + b1_ref[...], 0.0).astype(jnp.bfloat16)
    y1 = y1.reshape(P, R, y1.shape[-1])               # (4, R, h4); each phase slab contiguous
    y1_0, y1_1, y1_2, y1_3 = y1[0], y1[1], y1[2], y1[3]

    # ---- conv2 (k=4, s=2) + ReLU: polyphase even / odd output streams -----------------------
    #   y2[2s]   = y1[4s]  W0 + y1[4s+1]W1 + y1[4s+2]W2 + y1[4s+3]W3
    #   y2[2s+1] = y1[4s+2]W0 + y1[4s+3]W1 + y1[4s+4]W2 + y1[4s+5]W3
    # shift_up only crosses a (b)-chunk boundary at rows s = L4p-1, which are never consumed
    # by any valid output, so the merged-row shift is exact on all kept rows.
    w2 = w2_ref[...]
    ev = mm(y1_0, w2[0]); ev += mm(y1_1, w2[1]); ev += mm(y1_2, w2[2]); ev += mm(y1_3, w2[3])
    od = mm(y1_2, w2[0]); od += mm(y1_3, w2[1])
    od += mm(shift_up(y1_0), w2[2]); od += mm(shift_up(y1_1), w2[3])
    y2e = jnp.maximum(ev + b2_ref[...], 0.0).astype(jnp.bfloat16)    # (R, h2)
    y2o = jnp.maximum(od + b2_ref[...], 0.0).astype(jnp.bfloat16)    # (R, h2)

    # ---- conv3 (k=4, s=2) + ReLU -------------------------------------------------------------
    #   y3[u] = y2e[u]W0 + y2o[u]W1 + y2e[u+1]W2 + y2o[u+1]W3
    w3 = w3_ref[...]
    z = mm(y2e, w3[0]); z += mm(y2o, w3[1])
    z += mm(shift_up(y2e), w3[2]); z += mm(shift_up(y2o), w3[3])
    y3 = jnp.maximum(z + b3_ref[...], 0.0).astype(jnp.bfloat16)      # (R, h)

    # ---- conv4 (1x1), no activation; single merged-slab store --------------------------------
    o_ref[...] = (mm(y3, w4_ref[...]) + b4_ref[...]).astype(o_ref.dtype)


# ----------------------------------------------------------------------------- wrapper

def encoder_conv_forward(x_ncl, params, *, block_batch=None,
                         vmem_limit_bytes=48 * 1024 * 1024):
    """x_ncl: (N, in_dim, L) — PyTorch Conv1d layout.  Returns (N, out_dim, L_out)."""
    N, C_in, L = x_ncl.shape
    assert L >= 10, "two valid (k=4, s=2) convs need L >= 10"

    L2 = (L - 4) // 2 + 1
    L3 = (L2 - 4) // 2 + 1                       # true torch output length
    L_pad = 4 * pl.cdiv(L, 4)                    # time padded to a multiple of 4 (zeros)
    L4 = L_pad // 4                              # per-phase length
    L4p = 8 * pl.cdiv(L4, 8)                     # sublane-aligned per-phase length

    h4 = params["w1"].shape[1]
    h2 = params["w2"].shape[2]
    h = params["w3"].shape[2]
    out_dim = params["w4"].shape[1]

    if block_batch is None:
        # Per-sample VMEM footprint: double-buffered in/out blocks + f32/bf16 intermediates.
        per_sample = (2 * (4 * L4p * C_in * 2)       # input block (bf16, double-buffered)
                      + 2 * (L4p * out_dim * 4)      # output block (f32, double-buffered)
                      + 4 * L4p * h4 * 6             # y1 (f32 accumulator + bf16 copy)
                      + 2 * L4p * h2 * 8             # y2e / y2o (+ shifted copies)
                      + L4p * h * 8                  # y3 (+ shifted copy)
                      + L4p * out_dim * 4)           # y4
        budget = vmem_limit_bytes // 3               # headroom for weights + compiler temps
        block_batch = max(1, min(N, budget // max(per_sample, 1), 4096 // max(L4p, 1)))
        # keep a few grid steps so both v7x TensorCores get balanced work
        min_steps = 8 if N >= 64 else (2 if N >= 2 else 1)
        block_batch = max(1, min(block_batch, pl.cdiv(N, min_steps)))

    n_blocks = pl.cdiv(N, block_batch)
    N_pad = n_blocks * block_batch

    # NCL -> NLC, zero-pad batch/time, polyphase split t = 4*s + p with phases leading so every
    # per-phase slab the kernel touches is a contiguous, sublane-aligned block.
    x_nlc = jnp.transpose(x_ncl, (0, 2, 1)).astype(jnp.bfloat16)
    x_nlc = jnp.pad(x_nlc, ((0, N_pad - N), (0, L_pad - L), (0, 0)))
    xp = x_nlc.reshape(N_pad, L4, 4, C_in).transpose(2, 0, 1, 3)     # (4, N_pad, L4, C_in)
    xp = jnp.pad(xp, ((0, 0), (0, 0), (0, L4p - L4), (0, 0)))        # (4, N_pad, L4p, C_in)

    R = block_batch * L4p
    flops = 2 * N_pad * L4p * (4 * C_in * h4 + 8 * h4 * h2 + 4 * h2 * h + h * out_dim)
    bytes_w = sum(int(np.prod(params[k].shape)) * params[k].dtype.itemsize
                  for k in ("w1", "b1", "w2", "b2", "w3", "b3", "w4", "b4"))
    bytes_accessed = int(N_pad * 4 * L4p * C_in * 2 + bytes_w + N_pad * L4p * out_dim * 4)

    out2d = pl.pallas_call(
        _encoder_conv_kernel,
        out_shape=jax.ShapeDtypeStruct((N_pad * L4p, out_dim), jnp.float32),
        grid=(n_blocks,),
        in_specs=[
            pl.BlockSpec((4, block_batch, L4p, C_in), lambda i: (0, i, 0, 0)),
            # weights / biases: grid-invariant whole-array blocks
            pl.BlockSpec(params["w1"].shape, lambda i: (0, 0)),
            pl.BlockSpec(params["b1"].shape, lambda i: (0, 0)),
            pl.BlockSpec(params["w2"].shape, lambda i: (0, 0, 0)),
            pl.BlockSpec(params["b2"].shape, lambda i: (0, 0)),
            pl.BlockSpec(params["w3"].shape, lambda i: (0, 0, 0)),
            pl.BlockSpec(params["b3"].shape, lambda i: (0, 0)),
            pl.BlockSpec(params["w4"].shape, lambda i: (0, 0)),
            pl.BlockSpec(params["b4"].shape, lambda i: (0, 0)),
        ],
        # one merged (B_blk*L4p, out_dim) slab per step (lane-dense store option from review)
        out_specs=pl.BlockSpec((R, out_dim), lambda i: (i, 0)),
        compiler_params=pltpu.CompilerParams(
            dimension_semantics=("parallel",),
            vmem_limit_bytes=vmem_limit_bytes),      # raise toward ~100 MiB on v5e/v6e if desired
        cost_estimate=pl.CostEstimate(flops=flops, transcendentals=0,
                                      bytes_accessed=bytes_accessed),
    )(xp, params["w1"], params["b1"], params["w2"], params["b2"],
      params["w3"], params["b3"], params["w4"], params["b4"])

    out = out2d.reshape(N_pad, L4p, out_dim)[:N, :L3, :]
    return jnp.transpose(out, (0, 2, 1))             # (N, out_dim, L3) — torch Conv1d layout


# ----------------------------------------------------------------------------- parameters

def init_params(key, in_dim, out_dim, h_dim):
    """Weights in matmul layout: 1x1 convs as (C_in, C_out); k=4 convs as (tap, C_in, C_out).
    Weights are bf16 (MXU inputs), biases f32 (1, C)."""
    h4, h2 = h_dim // 4, h_dim // 2
    ks = jax.random.split(key, 8)

    def w(k, shape, fan_in):
        return jax.random.normal(k, shape, jnp.float32) / np.sqrt(fan_in)

    return dict(
        w1=w(ks[0], (in_dim, h4), in_dim).astype(jnp.bfloat16),
        b1=w(ks[1], (1, h4), in_dim),
        w2=w(ks[2], (4, h4, h2), 4 * h4).astype(jnp.bfloat16),
        b2=w(ks[3], (1, h2), 4 * h4),
        w3=w(ks[4], (4, h2, h_dim), 4 * h2).astype(jnp.bfloat16),
        b3=w(ks[5], (1, h_dim), 4 * h2),
        w4=w(ks[6], (h_dim, out_dim), h_dim).astype(jnp.bfloat16),
        b4=w(ks[7], (1, out_dim), h_dim),
    )


# ----------------------------------------------------------------------------- pure-JAX reference

def _conv1d_valid(x_nlc, w_kio, b, stride):
    y = jax.lax.conv_general_dilated(
        x_nlc, w_kio, window_strides=(stride,), padding="VALID",
        dimension_numbers=("NWC", "WIO", "NWC"))
    return y + b


def encoder_conv_reference(x_ncl, p):
    f32 = jnp.float32
    x = jnp.transpose(x_ncl, (0, 2, 1)).astype(f32)
    y = jax.nn.relu(x @ p["w1"].astype(f32) + p["b1"])
    y = jax.nn.relu(_conv1d_valid(y, p["w2"].astype(f32), p["b2"], 2))
    y = jax.nn.relu(_conv1d_valid(y, p["w3"].astype(f32), p["b3"], 2))
    y = y @ p["w4"].astype(f32) + p["b4"]
    return jnp.transpose(y, (0, 2, 1))


# ----------------------------------------------------------------------------- main

if __name__ == "__main__":
    N, in_dim, L = 8, 4, 32
    h_dim, out_dim = 32, 16
    # (n_res_layers / res_h_dim only configure residual_stack, which forward() never calls.)

    key = jax.random.PRNGKey(0)
    kx, kp = jax.random.split(key)
    x = jax.random.normal(kx, (N, in_dim, L), jnp.float32)       # (N, C_in, L) torch layout
    params = init_params(kp, in_dim, out_dim, h_dim)

    out = jax.block_until_ready(encoder_conv_forward(x, params, block_batch=4))  # grid=(2,)

    L2 = (L - 4) // 2 + 1
    L3 = (L2 - 4) // 2 + 1
    assert out.shape == (N, out_dim, L3), out.shape
    assert bool(jnp.all(jnp.isfinite(out)))

    ref = encoder_conv_reference(x, params)
    assert bool(jnp.allclose(out, ref, rtol=5e-2, atol=5e-2)), \
        float(jnp.max(jnp.abs(out - ref)))

    # ragged case: L not a multiple of 4 and batch not a multiple of the block (auto block_batch)
    x2 = jax.random.normal(kx, (3, in_dim, 30), jnp.float32)
    out2 = jax.block_until_ready(encoder_conv_forward(x2, params))
    ref2 = encoder_conv_reference(x2, params)
    assert out2.shape == ref2.shape, (out2.shape, ref2.shape)
    assert bool(jnp.allclose(out2, ref2, rtol=5e-2, atol=5e-2)), \
        float(jnp.max(jnp.abs(out2 - ref2)))

    print("KERNEL_OK")
</pallas_src>

<mosaic_0001>
module attributes {stable_mosaic.version = 11 : i64} {
  func.func @_encoder_conv_kernel(%arg0: i32, %arg1: memref<4x4x8x4xbf16, #tpu.memory_space<vmem>>, %arg2: memref<4x8xbf16, #tpu.memory_space<vmem>>, %arg3: memref<1x8xf32, #tpu.memory_space<vmem>>, %arg4: memref<4x8x16xbf16, #tpu.memory_space<vmem>>, %arg5: memref<1x16xf32, #tpu.memory_space<vmem>>, %arg6: memref<4x16x32xbf16, #tpu.memory_space<vmem>>, %arg7: memref<1x32xf32, #tpu.memory_space<vmem>>, %arg8: memref<32x16xbf16, #tpu.memory_space<vmem>>, %arg9: memref<1x16xf32, #tpu.memory_space<vmem>>, %arg10: memref<32x16xf32, #tpu.memory_space<vmem>>) attributes {dimension_semantics = [#tpu.dimension_semantics<parallel>], iteration_bounds = array<i64: 2>, scalar_prefetch = 0 : i64, scratch_operands = 0 : i64, tpu.core_type = #tpu.core_type<tc>, window_params = [{transform_indices = @transform_0, window_bounds = array<i64: 4, 4, 8, 4>}, {pipeline_mode = #tpu.pipeline_mode<synchronous>, transform_indices = @transform_1, window_bounds = array<i64: 4, 8>}, {pipeline_mode = #tpu.pipeline_mode<synchronous>, transform_indices = @transform_2, window_bounds = array<i64: 1, 8>}, {pipeline_mode = #tpu.pipeline_mode<synchronous>, transform_indices = @transform_3, window_bounds = array<i64: 4, 8, 16>}, {pipeline_mode = #tpu.pipeline_mode<synchronous>, transform_indices = @transform_4, window_bounds = array<i64: 1, 16>}, {pipeline_mode = #tpu.pipeline_mode<synchronous>, transform_indices = @transform_5, window_bounds = array<i64: 4, 16, 32>}, {pipeline_mode = #tpu.pipeline_mode<synchronous>, transform_indices = @transform_6, window_bounds = array<i64: 1, 32>}, {pipeline_mode = #tpu.pipeline_mode<synchronous>, transform_indices = @transform_7, window_bounds = array<i64: 32, 16>}, {pipeline_mode = #tpu.pipeline_mode<synchronous>, transform_indices = @transform_8, window_bounds = array<i64: 1, 16>}, {transform_indices = @transform_9, window_bounds = array<i64: 32, 16>}]} {
    %c0 = arith.constant 0 : index
    %c0_0 = arith.constant 0 : index
    %c0_1 = arith.constant 0 : index
    %c0_2 = arith.constant 0 : index
    %0 = vector.load %arg1[%c0, %c0_0, %c0_1, %c0_2] : memref<4x4x8x4xbf16, #tpu.memory_space<vmem>>, vector<4x4x8x4xbf16>
    %1 = vector.shape_cast %0 : vector<4x4x8x4xbf16> to vector<128x4xbf16>
    %c0_3 = arith.constant 0 : index
    %c0_4 = arith.constant 0 : index
    %2 = vector.load %arg2[%c0_3, %c0_4] : memref<4x8xbf16, #tpu.memory_space<vmem>>, vector<4x8xbf16>
    %cst = arith.constant dense<0.000000e+00> : vector<128x8xf32>
    %3 = tpu.matmul %1, %2, %cst {dimension_numbers = #tpu.dot_dimension_numbers<[1], [0], [0], [1], [0, 0, 1, 1], [], []>} : vector<128x4xbf16>, vector<4x8xbf16>, vector<128x8xf32> -> vector<128x8xf32>
    %c0_5 = arith.constant 0 : index
    %c0_6 = arith.constant 0 : index
    %4 = vector.load %arg3[%c0_5, %c0_6] : memref<1x8xf32, #tpu.memory_space<vmem>>, vector<1x8xf32>
    %5 = vector.broadcast %4 : vector<1x8xf32> to vector<128x8xf32>
    %6 = arith.addf %3, %5 : vector<128x8xf32>
    %cst_7 = arith.constant 0.000000e+00 : f32
    %7 = vector.broadcast %cst_7 : f32 to vector<128x8xf32>
    %8 = arith.maximumf %6, %7 : vector<128x8xf32>
    %9 = arith.truncf %8 : vector<128x8xf32> to vector<128x8xbf16>
    %10 = vector.shape_cast %9 : vector<128x8xbf16> to vector<4x32x8xbf16>
    %11 = vector.extract_strided_slice %10 {offsets = [0, 0, 0], sizes = [1, 32, 8], strides = [1, 1, 1]} : vector<4x32x8xbf16> to vector<1x32x8xbf16>
    %12 = vector.shape_cast %11 : vector<1x32x8xbf16> to vector<32x8xbf16>
    %13 = vector.extract_strided_slice %10 {offsets = [1, 0, 0], sizes = [1, 32, 8], strides = [1, 1, 1]} : vector<4x32x8xbf16> to vector<1x32x8xbf16>
    %14 = vector.shape_cast %13 : vector<1x32x8xbf16> to vector<32x8xbf16>
    %15 = vector.extract_strided_slice %10 {offsets = [2, 0, 0], sizes = [1, 32, 8], strides = [1, 1, 1]} : vector<4x32x8xbf16> to vector<1x32x8xbf16>
    %16 = vector.shape_cast %15 : vector<1x32x8xbf16> to vector<32x8xbf16>
    %17 = vector.extract_strided_slice %10 {offsets = [3, 0, 0], sizes = [1, 32, 8], strides = [1, 1, 1]} : vector<4x32x8xbf16> to vector<1x32x8xbf16>
    %18 = vector.shape_cast %17 : vector<1x32x8xbf16> to vector<32x8xbf16>
    %c0_8 = arith.constant 0 : index
    %c0_9 = arith.constant 0 : index
    %c0_10 = arith.constant 0 : index
    %19 = vector.load %arg4[%c0_8, %c0_9, %c0_10] : memref<4x8x16xbf16, #tpu.memory_space<vmem>>, vector<4x8x16xbf16>
    %20 = vector.extract_strided_slice %19 {offsets = [0, 0, 0], sizes = [1, 8, 16], strides = [1, 1, 1]} : vector<4x8x16xbf16> to vector<1x8x16xbf16>
    %21 = vector.shape_cast %20 : vector<1x8x16xbf16> to vector<8x16xbf16>
    %cst_11 = arith.constant dense<0.000000e+00> : vector<32x16xf32>
    %22 = tpu.matmul %12, %21, %cst_11 {dimension_numbers = #tpu.dot_dimension_numbers<[1], [0], [0], [1], [0, 0, 1, 1], [], []>} : vector<32x8xbf16>, vector<8x16xbf16>, vector<32x16xf32> -> vector<32x16xf32>
    %23 = vector.extract_strided_slice %19 {offsets = [1, 0, 0], sizes = [1, 8, 16], strides = [1, 1, 1]} : vector<4x8x16xbf16> to vector<1x8x16xbf16>
    %24 = vector.shape_cast %23 : vector<1x8x16xbf16> to vector<8x16xbf16>
    %cst_12 = arith.constant dense<0.000000e+00> : vector<32x16xf32>
    %25 = tpu.matmul %14, %24, %cst_12 {dimension_numbers = #tpu.dot_dimension_numbers<[1], [0], [0], [1], [0, 0, 1, 1], [], []>} : vector<32x8xbf16>, vector<8x16xbf16>, vector<32x16xf32> -> vector<32x16xf32>
    %26 = arith.addf %22, %25 : vector<32x16xf32>
    %27 = vector.extract_strided_slice %19 {offsets = [2, 0, 0], sizes = [1, 8, 16], strides = [1, 1, 1]} : vector<4x8x16xbf16> to vector<1x8x16xbf16>
    %28 = vector.shape_cast %27 : vector<1x8x16xbf16> to vector<8x16xbf16>
    %cst_13 = arith.constant dense<0.000000e+00> : vector<32x16xf32>
    %29 = tpu.matmul %16, %28, %cst_13 {dimension_numbers = #tpu.dot_dimension_numbers<[1], [0], [0], [1], [0, 0, 1, 1], [], []>} : vector<32x8xbf16>, vector<8x16xbf16>, vector<32x16xf32> -> vector<32x16xf32>
    %30 = arith.addf %26, %29 : vector<32x16xf32>
    %31 = vector.extract_strided_slice %19 {offsets = [3, 0, 0], sizes = [1, 8, 16], strides = [1, 1, 1]} : vector<4x8x16xbf16> to vector<1x8x16xbf16>
    %32 = vector.shape_cast %31 : vector<1x8x16xbf16> to vector<8x16xbf16>
    %cst_14 = arith.constant dense<0.000000e+00> : vector<32x16xf32>
    %33 = tpu.matmul %18, %32, %cst_14 {dimension_numbers = #tpu.dot_dimension_numbers<[1], [0], [0], [1], [0, 0, 1, 1], [], []>} : vector<32x8xbf16>, vector<8x16xbf16>, vector<32x16xf32> -> vector<32x16xf32>
    %34 = arith.addf %30, %33 : vector<32x16xf32>
    %35 = vector.extract_strided_slice %19 {offsets = [0, 0, 0], sizes = [1, 8, 16], strides = [1, 1, 1]} : vector<4x8x16xbf16> to vector<1x8x16xbf16>
    %36 = vector.shape_cast %35 : vector<1x8x16xbf16> to vector<8x16xbf16>
    %cst_15 = arith.constant dense<0.000000e+00> : vector<32x16xf32>
    %37 = tpu.matmul %16, %36, %cst_15 {dimension_numbers = #tpu.dot_dimension_numbers<[1], [0], [0], [1], [0, 0, 1, 1], [], []>} : vector<32x8xbf16>, vector<8x16xbf16>, vector<32x16xf32> -> vector<32x16xf32>
    %38 = vector.extract_strided_slice %19 {offsets = [1, 0, 0], sizes = [1, 8, 16], strides = [1, 1, 1]} : vector<4x8x16xbf16> to vector<1x8x16xbf16>
    %39 = vector.shape_cast %38 : vector<1x8x16xbf16> to vector<8x16xbf16>
    %cst_16 = arith.constant dense<0.000000e+00> : vector<32x16xf32>
    %40 = tpu.matmul %18, %39, %cst_16 {dimension_numbers = #tpu.dot_dimension_numbers<[1], [0], [0], [1], [0, 0, 1, 1], [], []>} : vector<32x8xbf16>, vector<8x16xbf16>, vector<32x16xf32> -> vector<32x16xf32>
    %41 = arith.addf %37, %40 : vector<32x16xf32>
    %42 = vector.extract_strided_slice %12 {offsets = [1, 0], sizes = [31, 8], strides = [1, 1]} : vector<32x8xbf16> to vector<31x8xbf16>
    %43 = vector.extract_strided_slice %12 {offsets = [0, 0], sizes = [1, 8], strides = [1, 1]} : vector<32x8xbf16> to vector<1x8xbf16>
    %44 = tpu.concatenate %42, %43 in 0 : vector<31x8xbf16>, vector<1x8xbf16> -> vector<32x8xbf16>
    %45 = vector.extract_strided_slice %19 {offsets = [2, 0, 0], sizes = [1, 8, 16], strides = [1, 1, 1]} : vector<4x8x16xbf16> to vector<1x8x16xbf16>
    %46 = vector.shape_cast %45 : vector<1x8x16xbf16> to vector<8x16xbf16>
    %cst_17 = arith.constant dense<0.000000e+00> : vector<32x16xf32>
    %47 = tpu.matmul %44, %46, %cst_17 {dimension_numbers = #tpu.dot_dimension_numbers<[1], [0], [0], [1], [0, 0, 1, 1], [], []>} : vector<32x8xbf16>, vector<8x16xbf16>, vector<32x16xf32> -> vector<32x16xf32>
    %48 = arith.addf %41, %47 : vector<32x16xf32>
    %49 = vector.extract_strided_slice %14 {offsets = [1, 0], sizes = [31, 8], strides = [1, 1]} : vector<32x8xbf16> to vector<31x8xbf16>
    %50 = vector.extract_strided_slice %14 {offsets = [0, 0], sizes = [1, 8], strides = [1, 1]} : vector<32x8xbf16> to vector<1x8xbf16>
    %51 = tpu.concatenate %49, %50 in 0 : vector<31x8xbf16>, vector<1x8xbf16> -> vector<32x8xbf16>
    %52 = vector.extract_strided_slice %19 {offsets = [3, 0, 0], sizes = [1, 8, 16], strides = [1, 1, 1]} : vector<4x8x16xbf16> to vector<1x8x16xbf16>
    %53 = vector.shape_cast %52 : vector<1x8x16xbf16> to vector<8x16xbf16>
    %cst_18 = arith.constant dense<0.000000e+00> : vector<32x16xf32>
    %54 = tpu.matmul %51, %53, %cst_18 {dimension_numbers = #tpu.dot_dimension_numbers<[1], [0], [0], [1], [0, 0, 1, 1], [], []>} : vector<32x8xbf16>, vector<8x16xbf16>, vector<32x16xf32> -> vector<32x16xf32>
    %55 = arith.addf %48, %54 : vector<32x16xf32>
    %c0_19 = arith.constant 0 : index
    %c0_20 = arith.constant 0 : index
    %56 = vector.load %arg5[%c0_19, %c0_20] : memref<1x16xf32, #tpu.memory_space<vmem>>, vector<1x16xf32>
    %57 = vector.broadcast %56 : vector<1x16xf32> to vector<32x16xf32>
    %58 = arith.addf %34, %57 : vector<32x16xf32>
    %cst_21 = arith.constant 0.000000e+00 : f32
    %59 = vector.broadcast %cst_21 : f32 to vector<32x16xf32>
    %60 = arith.maximumf %58, %59 : vector<32x16xf32>
    %61 = arith.truncf %60 : vector<32x16xf32> to vector<32x16xbf16>
    %c0_22 = arith.constant 0 : index
    %c0_23 = arith.constant 0 : index
    %62 = vector.load %arg5[%c0_22, %c0_23] : memref<1x16xf32, #tpu.memory_space<vmem>>, vector<1x16xf32>
    %63 = vector.broadcast %62 : vector<1x16xf32> to vector<32x16xf32>
    %64 = arith.addf %55, %63 : vector<32x16xf32>
    %cst_24 = arith.constant 0.000000e+00 : f32
    %65 = vector.broadcast %cst_24 : f32 to vector<32x16xf32>
    %66 = arith.maximumf %64, %65 : vector<32x16xf32>
    %67 = arith.truncf %66 : vector<32x16xf32> to vector<32x16xbf16>
    %c0_25 = arith.constant 0 : index
    %c0_26 = arith.constant 0 : index
    %c0_27 = arith.constant 0 : index
    %68 = vector.load %arg6[%c0_25, %c0_26, %c0_27] : memref<4x16x32xbf16, #tpu.memory_space<vmem>>, vector<4x16x32xbf16>
    %69 = vector.extract_strided_slice %68 {offsets = [0, 0, 0], sizes = [1, 16, 32], strides = [1, 1, 1]} : vector<4x16x32xbf16> to vector<1x16x32xbf16>
    %70 = vector.shape_cast %69 : vector<1x16x32xbf16> to vector<16x32xbf16>
    %cst_28 = arith.constant dense<0.000000e+00> : vector<32x32xf32>
    %71 = tpu.matmul %61, %70, %cst_28 {dimension_numbers = #tpu.dot_dimension_numbers<[1], [0], [0], [1], [0, 0, 1, 1], [], []>} : vector<32x16xbf16>, vector<16x32xbf16>, vector<32x32xf32> -> vector<32x32xf32>
    %72 = vector.extract_strided_slice %68 {offsets = [1, 0, 0], sizes = [1, 16, 32], strides = [1, 1, 1]} : vector<4x16x32xbf16> to vector<1x16x32xbf16>
    %73 = vector.shape_cast %72 : vector<1x16x32xbf16> to vector<16x32xbf16>
    %cst_29 = arith.constant dense<0.000000e+00> : vector<32x32xf32>
    %74 = tpu.matmul %67, %73, %cst_29 {dimension_numbers = #tpu.dot_dimension_numbers<[1], [0], [0], [1], [0, 0, 1, 1], [], []>} : vector<32x16xbf16>, vector<16x32xbf16>, vector<32x32xf32> -> vector<32x32xf32>
    %75 = arith.addf %71, %74 : vector<32x32xf32>
    %76 = vector.extract_strided_slice %61 {offsets = [1, 0], sizes = [31, 16], strides = [1, 1]} : vector<32x16xbf16> to vector<31x16xbf16>
    %77 = vector.extract_strided_slice %61 {offsets = [0, 0], sizes = [1, 16], strides = [1, 1]} : vector<32x16xbf16> to vector<1x16xbf16>
    %78 = tpu.concatenate %76, %77 in 0 : vector<31x16xbf16>, vector<1x16xbf16> -> vector<32x16xbf16>
    %79 = vector.extract_strided_slice %68 {offsets = [2, 0, 0], sizes = [1, 16, 32], strides = [1, 1, 1]} : vector<4x16x32xbf16> to vector<1x16x32xbf16>
    %80 = vector.shape_cast %79 : vector<1x16x32xbf16> to vector<16x32xbf16>
    %cst_30 = arith.constant dense<0.000000e+00> : vector<32x32xf32>
    %81 = tpu.matmul %78, %80, %cst_30 {dimension_numbers = #tpu.dot_dimension_numbers<[1], [0], [0], [1], [0, 0, 1, 1], [], []>} : vector<32x16xbf16>, vector<16x32xbf16>, vector<32x32xf32> -> vector<32x32xf32>
    %82 = arith.addf %75, %81 : vector<32x32xf32>
    %83 = vector.extract_strided_slice %67 {offsets = [1, 0], sizes = [31, 16], strides = [1, 1]} : vector<32x16xbf16> to vector<31x16xbf16>
    %84 = vector.extract_strided_slice %67 {offsets = [0, 0], sizes = [1, 16], strides = [1, 1]} : vector<32x16xbf16> to vector<1x16xbf16>
    %85 = tpu.concatenate %83, %84 in 0 : vector<31x16xbf16>, vector<1x16xbf16> -> vector<32x16xbf16>
    %86 = vector.extract_strided_slice %68 {offsets = [3, 0, 0], sizes = [1, 16, 32], strides = [1, 1, 1]} : vector<4x16x32xbf16> to vector<1x16x32xbf16>
    %87 = vector.shape_cast %86 : vector<1x16x32xbf16> to vector<16x32xbf16>
    %cst_31 = arith.constant dense<0.000000e+00> : vector<32x32xf32>
    %88 = tpu.matmul %85, %87, %cst_31 {dimension_numbers = #tpu.dot_dimension_numbers<[1], [0], [0], [1], [0, 0, 1, 1], [], []>} : vector<32x16xbf16>, vector<16x32xbf16>, vector<32x32xf32> -> vector<32x32xf32>
    %89 = arith.addf %82, %88 : vector<32x32xf32>
    %c0_32 = arith.constant 0 : index
    %c0_33 = arith.constant 0 : index
    %90 = vector.load %arg7[%c0_32, %c0_33] : memref<1x32xf32, #tpu.memory_space<vmem>>, vector<1x32xf32>
    %91 = vector.broadcast %90 : vector<1x32xf32> to vector<32x32xf32>
    %92 = arith.addf %89, %91 : vector<32x32xf32>
    %cst_34 = arith.constant 0.000000e+00 : f32
    %93 = vector.broadcast %cst_34 : f32 to vector<32x32xf32>
    %94 = arith.maximumf %92, %93 : vector<32x32xf32>
    %95 = arith.truncf %94 : vector<32x32xf32> to vector<32x32xbf16>
    %c0_35 = arith.constant 0 : index
    %c0_36 = arith.constant 0 : index
    %96 = vector.load %arg8[%c0_35, %c0_36] : memref<32x16xbf16, #tpu.memory_space<vmem>>, vector<32x16xbf16>
    %cst_37 = arith.constant dense<0.000000e+00> : vector<32x16xf32>
    %97 = tpu.matmul %95, %96, %cst_37 {dimension_numbers = #tpu.dot_dimension_numbers<[1], [0], [0], [1], [0, 0, 1, 1], [], []>} : vector<32x32xbf16>, vector<32x16xbf16>, vector<32x16xf32> -> vector<32x16xf32>
    %c0_38 = arith.constant 0 : index
    %c0_39 = arith.constant 0 : index
    %98 = vector.load %arg9[%c0_38, %c0_39] : memref<1x16xf32, #tpu.memory_space<vmem>>, vector<1x16xf32>
    %99 = vector.broadcast %98 : vector<1x16xf32> to vector<32x16xf32>
    %100 = arith.addf %97, %99 : vector<32x16xf32>
    %c0_40 = arith.constant 0 : index
    %c0_41 = arith.constant 0 : index
    %101 = vector.load %arg10[%c0_40, %c0_41] : memref<32x16xf32, #tpu.memory_space<vmem>>, vector<32x16xf32>
    tpu.vector_store %arg10[%c0_40, %c0_41], %100 {strides = array<i32>} : memref<32x16xf32, #tpu.memory_space<vmem>>, vector<32x16xf32>,
    return
  }
  func.func @transform_0(%arg0: i32) -> (i32, i32, i32, i32) {
    %c0_i32 = arith.constant 0 : i32
    %c0_i32_0 = arith.constant 0 : i32
    %c0_i32_1 = arith.constant 0 : i32
    %c0_i32_2 = arith.constant 0 : i32
    return %c0_i32, %arg0, %c0_i32_0, %c0_i32_1 : i32, i32, i32, i32
  }
  func.func @transform_1(%arg0: i32) -> (i32, i32) {
    %c0_i32 = arith.constant 0 : i32
    %c0_i32_0 = arith.constant 0 : i32
    %c0_i32_1 = arith.constant 0 : i32
    return %c0_i32, %c0_i32_0 : i32, i32
  }
  func.func @transform_2(%arg0: i32) -> (i32, i32) {
    %c0_i32 = arith.constant 0 : i32
    %c0_i32_0 = arith.constant 0 : i32
    %c0_i32_1 = arith.constant 0 : i32
    return %c0_i32, %c0_i32_0 : i32, i32
  }
  func.func @transform_3(%arg0: i32) -> (i32, i32, i32) {
    %c0_i32 = arith.constant 0 : i32
    %c0_i32_0 = arith.constant 0 : i32
    %c0_i32_1 = arith.constant 0 : i32
    %c0_i32_2 = arith.constant 0 : i32
    return %c0_i32, %c0_i32_0, %c0_i32_1 : i32, i32, i32
  }
  func.func @transform_4(%arg0: i32) -> (i32, i32) {
    %c0_i32 = arith.constant 0 : i32
    %c0_i32_0 = arith.constant 0 : i32
    %c0_i32_1 = arith.constant 0 : i32
    return %c0_i32, %c0_i32_0 : i32, i32
  }
  func.func @transform_5(%arg0: i32) -> (i32, i32, i32) {
    %c0_i32 = arith.constant 0 : i32
    %c0_i32_0 = arith.constant 0 : i32
    %c0_i32_1 = arith.constant 0 : i32
    %c0_i32_2 = arith.constant 0 : i32
    return %c0_i32, %c0_i32_0, %c0_i32_1 : i32, i32, i32
  }
  func.func @transform_6(%arg0: i32) -> (i32, i32) {
    %c0_i32 = arith.constant 0 : i32
    %c0_i32_0 = arith.constant 0 : i32
    %c0_i32_1 = arith.constant 0 : i32
    return %c0_i32, %c0_i32_0 : i32, i32
  }
  func.func @transform_7(%arg0: i32) -> (i32, i32) {
    %c0_i32 = arith.constant 0 : i32
    %c0_i32_0 = arith.constant 0 : i32
    %c0_i32_1 = arith.constant 0 : i32
    return %c0_i32, %c0_i32_0 : i32, i32
  }
  func.func @transform_8(%arg0: i32) -> (i32, i32) {
    %c0_i32 = arith.constant 0 : i32
    %c0_i32_0 = arith.constant 0 : i32
    %c0_i32_1 = arith.constant 0 : i32
    return %c0_i32, %c0_i32_0 : i32, i32
  }
  func.func @transform_9(%arg0: i32) -> (i32, i32) {
    %c0_i32 = arith.constant 0 : i32
    %c0_i32_0 = arith.constant 0 : i32
    return %arg0, %c0_i32 : i32, i32
  }
}

</mosaic_0001>

<llo_original>
// kernel: tpu_custom_call.1
$region0: #{tpu_custom_call.1}
  #allocation0 [shape = 'u32[]', space=smem, size = 0x4, offset = 0x4, fixed_abs, tag = 'smem constant byte address 0x4 - core index']
  #allocation1 [shape = 'u32[144,128]{1,0:T(1,128)}', space=vmem, size = 0x12000, scoped, tag = 'internal scratch']
  %s0 = inlined_call_operand.vmem [shape: bf16[4,8,8,4], index: 0, kind: input, shape index: {}]
  %s1 = inlined_call_operand.vmem [shape: bf16[4,8], index: 1, kind: input, shape index: {}]
  %s2 = inlined_call_operand.vmem [shape: f32[1,8], index: 2, kind: input, shape index: {}]
  %s3 = inlined_call_operand.vmem [shape: bf16[4,8,16], index: 3, kind: input, shape index: {}]
  %s4 = inlined_call_operand.vmem [shape: f32[1,16], index: 4, kind: input, shape index: {}]
  %s5 = inlined_call_operand.vmem [shape: bf16[4,16,32], index: 5, kind: input, shape index: {}]
  %s6 = inlined_call_operand.vmem [shape: f32[1,32], index: 6, kind: input, shape index: {}]
  %s7 = inlined_call_operand.vmem [shape: bf16[32,16], index: 7, kind: input, shape index: {}]
  %s8 = inlined_call_operand.vmem [shape: f32[1,16], index: 8, kind: input, shape index: {}]
  %s9 = inlined_call_operand.vmem [shape: f32[64,16], index: 9, kind: output, shape index: {}]
  %s10 = sld [smem:[#allocation0]]
  $region110: #{tpu_custom_call.1} parent=0
    _
  %s12 = ssub.s32 1, %s10
  %s13 = scalar_select 0, %s12, %s10
  $region1: #{tpu_custom_call.1} parent=0
    #allocation2 [shape = 'u8[65536]{0}', space=vmem, size = 0x10000, scoped, tag = 'input window, operand 0']
    loop: start=0, step=1, limit=4
    $region2: #{tpu_custom_call.1} parent=1 // loop_pre_header
      _
    $region3: #{tpu_custom_call.1} parent=1 // loop_header
      %s15 = sphi 0, %s19
      %p16 = scmp.ge.s32.totalorder %s15, 4
      %s25 = sphi 0, %s27
      %s28 = sphi 0, %s25
      %s29 = sphi 0, %s28
      %s45 = sphi 0, %s29
      %s49 = sphi 0, %s49
      %s51 = sphi 0, %s49
      %s52 = sphi 0, %s51
      %s66 = sphi 0, %s52
      %s70 = sphi 0, %s70
      %s72 = sphi 0, %s70
      %s73 = sphi 0, %s72
      %s87 = sphi 0, %s73
      %s91 = sphi 0, %s91
      %s93 = sphi 0, %s91
      %s94 = sphi 0, %s93
      %s108 = sphi 0, %s94
      %s112 = sphi 0, %s112
      %s114 = sphi 0, %s112
      %s115 = sphi 0, %s114
      %s129 = sphi 0, %s115
      %s133 = sphi 0, %s133
      %s135 = sphi 0, %s133
      %s136 = sphi 0, %s135
      %s150 = sphi 0, %s136
      %s154 = sphi 0, %s154
      %s156 = sphi 0, %s154
      %s157 = sphi 0, %s156
      %s171 = sphi 0, %s157
      %s175 = sphi 0, %s175
      %s177 = sphi 0, %s175
      %s178 = sphi 0, %s177
      %s192 = sphi 0, %s178
      %s196 = sphi 0, %s196
      %s198 = sphi 0, %s196
      %s199 = sphi 0, %s198
      %s213 = sphi 0, %s199
      %s219 = sphi 0, %s221
      %s222 = sphi 0, %s219
      %s223 = sphi 0, %s222
      %s239 = sphi 0, %s223
    $region4: #{tpu_custom_call.1} parent=1 // loop_header_branch
      %18 = sbr.rel (%p16) target = $region8
    $region5: #{tpu_custom_call.1} parent=1 // loop_body
      %s20 = ssub.s32 %s15, 1
      %s21 = ssub.s32 %s15, 2
      %s22 = sadd.s32 %s15, 1
      %s23 = ssub.s32 %s15, %s22
      %p24 = scmp.eq.s32.totalorder %s23, 0
      %s26 = sadd.s32 %s25, 1
      %s27 = scalar_select %p24, %s25, %s26
      %p30 = pneg %p24
      %p31 = scmp.eq.s32.totalorder %s15, 1
      %p32 = por %p30, %p31
      %p33 = scmp.ne.s32.totalorder %s25, %s28
      %p34 = scmp.eq.s32.totalorder %s15, 0
      %p35 = por %p33, %p34
      %p36 = scmp.ne.s32.totalorder %s25, %s28
      %p37 = scmp.eq.s32.totalorder %s20, 1
      %p38 = por %p36, %p37
      %p39 = scmp.ne.s32.totalorder %s28, %s29
      %p40 = scmp.eq.s32.totalorder %s20, 0
      %p41 = por %p39, %p40
      %p42 = scmp.ne.s32.totalorder %s28, %s29
      %p43 = scmp.eq.s32.totalorder %s21, 1
      %p44 = por %p42, %p43
      %p46 = scmp.ne.s32.totalorder %s29, %s45
      %p47 = scmp.eq.s32.totalorder %s21, 0
      %p48 = por %p46, %p47
      %s50 = sadd.s32 %s49, 1
      %p53 = scmp.eq.s32.totalorder %s15, 1
      %p54 = scmp.ne.s32.totalorder %s49, %s51
      %p55 = scmp.eq.s32.totalorder %s15, 0
      %p56 = por %p54, %p55
      %p57 = scmp.ne.s32.totalorder %s49, %s51
      %p58 = scmp.eq.s32.totalorder %s20, 1
      %p59 = por %p57, %p58
      %p60 = scmp.ne.s32.totalorder %s51, %s52
      %p61 = scmp.eq.s32.totalorder %s20, 0
      %p62 = por %p60, %p61
      %p63 = scmp.ne.s32.totalorder %s51, %s52
      %p64 = scmp.eq.s32.totalorder %s21, 1
      %p65 = por %p63, %p64
      %p67 = scmp.ne.s32.totalorder %s52, %s66
      %p68 = scmp.eq.s32.totalorder %s21, 0
      %p69 = por %p67, %p68
      %s71 = sadd.s32 %s70, 1
      %p74 = scmp.eq.s32.totalorder %s15, 1
      %p75 = scmp.ne.s32.totalorder %s70, %s72
      %p76 = scmp.eq.s32.totalorder %s15, 0
      %p77 = por %p75, %p76
      %p78 = scmp.ne.s32.totalorder %s70, %s72
      %p79 = scmp.eq.s32.totalorder %s20, 1
      %p80 = por %p78, %p79
      %p81 = scmp.ne.s32.totalorder %s72, %s73
      %p82 = scmp.eq.s32.totalorder %s20, 0
      %p83 = por %p81, %p82
      %p84 = scmp.ne.s32.totalorder %s72, %s73
      %p85 = scmp.eq.s32.totalorder %s21, 1
      %p86 = por %p84, %p85
      %p88 = scmp.ne.s32.totalorder %s73, %s87
      %p89 = scmp.eq.s32.totalorder %s21, 0
      %p90 = por %p88, %p89
      %s92 = sadd.s32 %s91, 1
      %p95 = scmp.eq.s32.totalorder %s15, 1
      %p96 = scmp.ne.s32.totalorder %s91, %s93
      %p97 = scmp.eq.s32.totalorder %s15, 0
      %p98 = por %p96, %p97
      %p99 = scmp.ne.s32.totalorder %s91, %s93
      %p100 = scmp.eq.s32.totalorder %s20, 1
      %p101 = por %p99, %p100
      %p102 = scmp.ne.s32.totalorder %s93, %s94
      %p103 = scmp.eq.s32.totalorder %s20, 0
      %p104 = por %p102, %p103
      %p105 = scmp.ne.s32.totalorder %s93, %s94
      %p106 = scmp.eq.s32.totalorder %s21, 1
      %p107 = por %p105, %p106
      %p109 = scmp.ne.s32.totalorder %s94, %s108
      %p110 = scmp.eq.s32.totalorder %s21, 0
      %p111 = por %p109, %p110
      %s113 = sadd.s32 %s112, 1
      %p116 = scmp.eq.s32.totalorder %s15, 1
      %p117 = scmp.ne.s32.totalorder %s112, %s114
      %p118 = scmp.eq.s32.totalorder %s15, 0
      %p119 = por %p117, %p118
      %p120 = scmp.ne.s32.totalorder %s112, %s114
      %p121 = scmp.eq.s32.totalorder %s20, 1
      %p122 = por %p120, %p121
      %p123 = scmp.ne.s32.totalorder %s114, %s115
      %p124 = scmp.eq.s32.totalorder %s20, 0
      %p125 = por %p123, %p124
      %p126 = scmp.ne.s32.totalorder %s114, %s115
      %p127 = scmp.eq.s32.totalorder %s21, 1
      %p128 = por %p126, %p127
      %p130 = scmp.ne.s32.totalorder %s115, %s129
      %p131 = scmp.eq.s32.totalorder %s21, 0
      %p132 = por %p130, %p131
      %s134 = sadd.s32 %s133, 1
      %p137 = scmp.eq.s32.totalorder %s15, 1
      %p138 = scmp.ne.s32.totalorder %s133, %s135
      %p139 = scmp.eq.s32.totalorder %s15, 0
      %p140 = por %p138, %p139
      %p141 = scmp.ne.s32.totalorder %s133, %s135
      %p142 = scmp.eq.s32.totalorder %s20, 1
      %p143 = por %p141, %p142
      %p144 = scmp.ne.s32.totalorder %s135, %s136
      %p145 = scmp.eq.s32.totalorder %s20, 0
      %p146 = por %p144, %p145
      %p147 = scmp.ne.s32.totalorder %s135, %s136
      %p148 = scmp.eq.s32.totalorder %s21, 1
      %p149 = por %p147, %p148
      %p151 = scmp.ne.s32.totalorder %s136, %s150
      %p152 = scmp.eq.s32.totalorder %s21, 0
      %p153 = por %p151, %p152
      %s155 = sadd.s32 %s154, 1
      %p158 = scmp.eq.s32.totalorder %s15, 1
      %p159 = scmp.ne.s32.totalorder %s154, %s156
      %p160 = scmp.eq.s32.totalorder %s15, 0
      %p161 = por %p159, %p160
      %p162 = scmp.ne.s32.totalorder %s154, %s156
      %p163 = scmp.eq.s32.totalorder %s20, 1
      %p164 = por %p162, %p163
      %p165 = scmp.ne.s32.totalorder %s156, %s157
      %p166 = scmp.eq.s32.totalorder %s20, 0
      %p167 = por %p165, %p166
      %p168 = scmp.ne.s32.totalorder %s156, %s157
      %p169 = scmp.eq.s32.totalorder %s21, 1
      %p170 = por %p168, %p169
      %p172 = scmp.ne.s32.totalorder %s157, %s171
      %p173 = scmp.eq.s32.totalorder %s21, 0
      %p174 = por %p172, %p173
      %s176 = sadd.s32 %s175, 1
      %p179 = scmp.eq.s32.totalorder %s15, 1
      %p180 = scmp.ne.s32.totalorder %s175, %s177
      %p181 = scmp.eq.s32.totalorder %s15, 0
      %p182 = por %p180, %p181
      %p183 = scmp.ne.s32.totalorder %s175, %s177
      %p184 = scmp.eq.s32.totalorder %s20, 1
      %p185 = por %p183, %p184
      %p186 = scmp.ne.s32.totalorder %s177, %s178
      %p187 = scmp.eq.s32.totalorder %s20, 0
      %p188 = por %p186, %p187
      %p189 = scmp.ne.s32.totalorder %s177, %s178
      %p190 = scmp.eq.s32.totalorder %s21, 1
      %p191 = por %p189, %p190
      %p193 = scmp.ne.s32.totalorder %s178, %s192
      %p194 = scmp.eq.s32.totalorder %s21, 0
      %p195 = por %p193, %p194
      %s197 = sadd.s32 %s196, 1
      %p200 = scmp.eq.s32.totalorder %s15, 1
      %p201 = scmp.ne.s32.totalorder %s196, %s198
      %p202 = scmp.eq.s32.totalorder %s15, 0
      %p203 = por %p201, %p202
      %p204 = scmp.ne.s32.totalorder %s196, %s198
      %p205 = scmp.eq.s32.totalorder %s20, 1
      %p206 = por %p204, %p205
      %p207 = scmp.ne.s32.totalorder %s198, %s199
      %p208 = scmp.eq.s32.totalorder %s20, 0
      %p209 = por %p207, %p208
      %p210 = scmp.ne.s32.totalorder %s198, %s199
      %p211 = scmp.eq.s32.totalorder %s21, 1
      %p212 = por %p210, %p211
      %p214 = scmp.ne.s32.totalorder %s199, %s213
      %p215 = scmp.eq.s32.totalorder %s21, 0
      %p216 = por %p214, %p215
      %s217 = ssub.s32 %s15, %s22
      %p218 = scmp.eq.s32.totalorder %s217, 0
      %s220 = sadd.s32 %s219, 1
      %s221 = scalar_select %p218, %s219, %s220
      %p224 = pneg %p218
      %p225 = scmp.eq.s32.totalorder %s15, 1
      %p226 = por %p224, %p225
      %p227 = scmp.ne.s32.totalorder %s219, %s222
      %p228 = scmp.eq.s32.totalorder %s15, 0
      %p229 = por %p227, %p228
      %p230 = scmp.ne.s32.totalorder %s219, %s222
      %p231 = scmp.eq.s32.totalorder %s20, 1
      %p232 = por %p230, %p231
      %p233 = scmp.ne.s32.totalorder %s222, %s223
      %p234 = scmp.eq.s32.totalorder %s20, 0
      %p235 = por %p233, %p234
      %p236 = scmp.ne.s32.totalorder %s222, %s223
      %p237 = scmp.eq.s32.totalorder %s21, 1
      %p238 = por %p236, %p237
      %p240 = scmp.ne.s32.totalorder %s223, %s239
      %p241 = scmp.eq.s32.totalorder %s21, 0
      %p242 = por %p240, %p241
      %p243 = scmp.le.s32.totalorder 1, %s15
      %p244 = scmp.lt.s32.totalorder %s15, 3
      %p245 = pnand %p243, %p244
      %p246 = pneg %p245
      // Predicated region
      $region9: #{tpu_custom_call.1} parent=5 // pred_check
        _
      $region10: #{tpu_custom_call.1} parent=5 // pred_check_branch
        %248 = sbr.rel (%p245) target = $region12
      $region11: #{tpu_custom_call.1} parent=5 // pred_region
        %s249 = ssub.s32 %s15, 1
        // Predicated region
        $region13: #{tpu_custom_call.1} parent=11 // pred_check
          %p250 = pneg %p62
        $region14: #{tpu_custom_call.1} parent=11 // pred_check_branch
          %252 = sbr.rel (%p250) target = $region16
        $region15: #{tpu_custom_call.1} parent=11 // pred_region
          _
        $region16: #{tpu_custom_call.1} parent=11 // pred_fallthru
          _
        // Predicated region
        $region17: #{tpu_custom_call.1} parent=11 // pred_check
          %p253 = pneg %p83
        $region18: #{tpu_custom_call.1} parent=11 // pred_check_branch
          %255 = sbr.rel (%p253) target = $region20
        $region19: #{tpu_custom_call.1} parent=11 // pred_region
          _
        $region20: #{tpu_custom_call.1} parent=11 // pred_fallthru
          _
        // Predicated region
        $region21: #{tpu_custom_call.1} parent=11 // pred_check
          %p256 = pneg %p104
        $region22: #{tpu_custom_call.1} parent=11 // pred_check_branch
          %258 = sbr.rel (%p256) target = $region24
        $region23: #{tpu_custom_call.1} parent=11 // pred_region
          _
        $region24: #{tpu_custom_call.1} parent=11 // pred_fallthru
          _
        // Predicated region
        $region25: #{tpu_custom_call.1} parent=11 // pred_check
          %p259 = pneg %p125
        $region26: #{tpu_custom_call.1} parent=11 // pred_check_branch
          %261 = sbr.rel (%p259) target = $region28
        $region27: #{tpu_custom_call.1} parent=11 // pred_region
          _
        $region28: #{tpu_custom_call.1} parent=11 // pred_fallthru
          _
        // Predicated region
        $region29: #{tpu_custom_call.1} parent=11 // pred_check
          %p262 = pneg %p146
        $region30: #{tpu_custom_call.1} parent=11 // pred_check_branch
          %264 = sbr.rel (%p262) target = $region32
        $region31: #{tpu_custom_call.1} parent=11 // pred_region
          _
        $region32: #{tpu_custom_call.1} parent=11 // pred_fallthru
          _
        // Predicated region
        $region33: #{tpu_custom_call.1} parent=11 // pred_check
          %p265 = pneg %p167
        $region34: #{tpu_custom_call.1} parent=11 // pred_check_branch
          %267 = sbr.rel (%p265) target = $region36
        $region35: #{tpu_custom_call.1} parent=11 // pred_region
          _
        $region36: #{tpu_custom_call.1} parent=11 // pred_fallthru
          _
        // Predicated region
        $region37: #{tpu_custom_call.1} parent=11 // pred_check
          %p268 = pneg %p188
        $region38: #{tpu_custom_call.1} parent=11 // pred_check_branch
          %270 = sbr.rel (%p268) target = $region40
        $region39: #{tpu_custom_call.1} parent=11 // pred_region
          _
        $region40: #{tpu_custom_call.1} parent=11 // pred_fallthru
          _
        // Predicated region
        $region41: #{tpu_custom_call.1} parent=11 // pred_check
          %p271 = pneg %p209
        $region42: #{tpu_custom_call.1} parent=11 // pred_check_branch
          %273 = sbr.rel (%p271) target = $region44
        $region43: #{tpu_custom_call.1} parent=11 // pred_region
          _
        $region44: #{tpu_custom_call.1} parent=11 // pred_fallthru
          _
      $region12: #{tpu_custom_call.1} parent=5 // pred_fallthru
        _
      %p274 = scmp.lt.s32.totalorder %s15, 2
      // Predicated region
      $region45: #{tpu_custom_call.1} parent=5 // pred_check
        %p275 = pneg %p274
      $region46: #{tpu_custom_call.1} parent=5 // pred_check_branch
        %277 = sbr.rel (%p275) target = $region48
      $region47: #{tpu_custom_call.1} parent=5 // pred_region
        // Predicated region
        $region49: #{tpu_custom_call.1} parent=47 // pred_check
          %p278 = pneg %p35
        $region50: #{tpu_custom_call.1} parent=47 // pred_check_branch
          %280 = sbr.rel (%p278) target = $region52
        $region51: #{tpu_custom_call.1} parent=47 // pred_region
          %s281 = sand.u32 %s25, 1
          %s282 = sand.u32 %s25, 1
          %s283 = smul.addr %s282, 64
          %s284 = scalar_lea.vmem [#allocation2], %s283
          %s285 = smul.u32 4, %s15
          %s286 = smul.addr %s285, 4
          %s287 = scalar_lea.vmem %s0, %s286
          // Predicated region
          $region53: #{tpu_custom_call.1} parent=51 // pred_check
            _
          $region54: #{tpu_custom_call.1} parent=51 // pred_check_branch
            %289 = sbr.rel (0) target = $region56
          $region55: #{tpu_custom_call.1} parent=51 // pred_region
            // Predicated region
            $region57: #{tpu_custom_call.1} parent=55 // pred_check
              _
            $region58: #{tpu_custom_call.1} parent=55 // pred_check_branch
              %291 = sbr.rel target = $region60
            $region59: #{tpu_custom_call.1} parent=55 // pred_region
              // Predicated region
              $region72: #{tpu_custom_call.1} parent=59 // pred_check
                _
              $region73: #{tpu_custom_call.1} parent=59 // pred_check_branch
                %336 = sbr.rel (0) target = $region75
              $region74: #{tpu_custom_call.1} parent=59 // pred_region
                loop: start=0, step=1, limit=1
                $region76: #{tpu_custom_call.1} parent=74 // loop_pre_header
                  _
                $region77: #{tpu_custom_call.1} parent=74 // loop_header
                  %s338 = sphi 0, %s342
                  %p339 = scmp.ge.s32.totalorder %s338, 1
                  %s343 = sphi %s287, %s287
                  %s344 = sphi %s284, %s284
                $region78: #{tpu_custom_call.1} parent=74 // loop_header_branch
                  %341 = sbr.rel (%p339) target = $region82
                $region79: #{tpu_custom_call.1} parent=74 // loop_body
                  _
                $region80: #{tpu_custom_call.1} parent=74 // loop_footer
                  %s342 = sadd.s32 1, %s338
                $region81: #{tpu_custom_call.1} parent=74 // loop_footer_branch
                  %337 = sbr.rel target = $region77
                $region82: #{tpu_custom_call.1} parent=74 // loop_exit
                  _
                loop: start=0, step=1, limit=1
                $region83: #{tpu_custom_call.1} parent=74 // loop_pre_header
                  _
                $region84: #{tpu_custom_call.1} parent=74 // loop_header
                  %s347 = sphi 0, %s351
                  %p348 = scmp.ge.s32.totalorder %s347, 1
                  %s352 = sphi %s287, %s287
                  %s353 = sphi %s284, %s284
                $region85: #{tpu_custom_call.1} parent=74 // loop_header_branch
                  %350 = sbr.rel (%p348) target = $region89
                $region86: #{tpu_custom_call.1} parent=74 // loop_body
                  %v354 = vld [vmem:[%s352] sm:$0xf]
                  %355 = vst [vmem:[%s353] sm:$0xf] %v354
                  %v356 = vld [vmem:[%s352 + $0x4] sm:$0xf]
                  %357 = vst [vmem:[%s353 + $0x4] sm:$0xf] %v356
                  %v358 = vld [vmem:[%s352 + $0x8] sm:$0xf]
                  %359 = vst [vmem:[%s353 + $0x8] sm:$0xf] %v358
                  %v360 = vld [vmem:[%s352 + $0xc] sm:$0xf]
                  %361 = vst [vmem:[%s353 + $0xc] sm:$0xf] %v360
                  %v362 = vld [vmem:[%s352 + $0x20] sm:$0xf]
                  %363 = vst [vmem:[%s353 + $0x10] sm:$0xf] %v362
                  %v364 = vld [vmem:[%s352 + $0x24] sm:$0xf]
                  %365 = vst [vmem:[%s353 + $0x14] sm:$0xf] %v364
                  %v366 = vld [vmem:[%s352 + $0x28] sm:$0xf]
                  %367 = vst [vmem:[%s353 + $0x18] sm:$0xf] %v366
                  %v368 = vld [vmem:[%s352 + $0x2c] sm:$0xf]
                  %369 = vst [vmem:[%s353 + $0x1c] sm:$0xf] %v368
                  %v370 = vld [vmem:[%s352 + $0x40] sm:$0xf]
                  %371 = vst [vmem:[%s353 + $0x20] sm:$0xf] %v370
                  %v372 = vld [vmem:[%s352 + $0x44] sm:$0xf]
                  %373 = vst [vmem:[%s353 + $0x24] sm:$0xf] %v372
                  %v374 = vld [vmem:[%s352 + $0x48] sm:$0xf]
                  %375 = vst [vmem:[%s353 + $0x28] sm:$0xf] %v374
                  %v376 = vld [vmem:[%s352 + $0x4c] sm:$0xf]
                  %377 = vst [vmem:[%s353 + $0x2c] sm:$0xf] %v376
                  %v378 = vld [vmem:[%s352 + $0x60] sm:$0xf]
                  %379 = vst [vmem:[%s353 + $0x30] sm:$0xf] %v378
                  %v380 = vld [vmem:[%s352 + $0x64] sm:$0xf]
                  %381 = vst [vmem:[%s353 + $0x34] sm:$0xf] %v380
                  %v382 = vld [vmem:[%s352 + $0x68] sm:$0xf]
                  %383 = vst [vmem:[%s353 + $0x38] sm:$0xf] %v382
                  %v384 = vld [vmem:[%s352 + $0x6c] sm:$0xf]
                  %385 = vst [vmem:[%s353 + $0x3c] sm:$0xf] %v384
                $region87: #{tpu_custom_call.1} parent=74 // loop_footer
                  %s351 = sadd.s32 1, %s347
                $region88: #{tpu_custom_call.1} parent=74 // loop_footer_branch
                  %346 = sbr.rel target = $region84
                $region89: #{tpu_custom_call.1} parent=74 // loop_exit
                  _
              $region75: #{tpu_custom_call.1} parent=59 // pred_fallthru
                _
            $region60: #{tpu_custom_call.1} parent=55 // pred_fallthru
              _
            // Predicated region
            $region61: #{tpu_custom_call.1} parent=55 // pred_check
              _
            $region62: #{tpu_custom_call.1} parent=55 // pred_check_branch
              %293 = sbr.rel (0) target = $region64
            $region63: #{tpu_custom_call.1} parent=55 // pred_region
              loop: start=0, step=1, limit=1
              $region65: #{tpu_custom_call.1} parent=63 // loop_pre_header
                _
              $region66: #{tpu_custom_call.1} parent=63 // loop_header
                %s296 = sphi 0, %s300
                %p297 = scmp.ge.s32.totalorder %s296, 1
                %s301 = sphi %s287, %s287
                %s302 = sphi %s284, %s284
              $region67: #{tpu_custom_call.1} parent=63 // loop_header_branch
                %299 = sbr.rel (%p297) target = $region71
              $region68: #{tpu_custom_call.1} parent=63 // loop_body
                %v303 = vld [vmem:[%s301] sm:$0xf]
                %304 = vst [vmem:[%s302] sm:$0xf] %v303
                %v305 = vld [vmem:[%s301 + $0x4] sm:$0xf]
                %306 = vst [vmem:[%s302 + $0x4] sm:$0xf] %v305
                %v307 = vld [vmem:[%s301 + $0x8] sm:$0xf]
                %308 = vst [vmem:[%s302 + $0x8] sm:$0xf] %v307
                %v309 = vld [vmem:[%s301 + $0xc] sm:$0xf]
                %310 = vst [vmem:[%s302 + $0xc] sm:$0xf] %v309
                %v311 = vld [vmem:[%s301 + $0x20] sm:$0xf]
                %312 = vst [vmem:[%s302 + $0x10] sm:$0xf] %v311
                %v313 = vld [vmem:[%s301 + $0x24] sm:$0xf]
                %314 = vst [vmem:[%s302 + $0x14] sm:$0xf] %v313
                %v315 = vld [vmem:[%s301 + $0x28] sm:$0xf]
                %316 = vst [vmem:[%s302 + $0x18] sm:$0xf] %v315
                %v317 = vld [vmem:[%s301 + $0x2c] sm:$0xf]
                %318 = vst [vmem:[%s302 + $0x1c] sm:$0xf] %v317
                %v319 = vld [vmem:[%s301 + $0x40] sm:$0xf]
                %320 = vst [vmem:[%s302 + $0x20] sm:$0xf] %v319
                %v321 = vld [vmem:[%s301 + $0x44] sm:$0xf]
                %322 = vst [vmem:[%s302 + $0x24] sm:$0xf] %v321
                %v323 = vld [vmem:[%s301 + $0x48] sm:$0xf]
                %324 = vst [vmem:[%s302 + $0x28] sm:$0xf] %v323
                %v325 = vld [vmem:[%s301 + $0x4c] sm:$0xf]
                %326 = vst [vmem:[%s302 + $0x2c] sm:$0xf] %v325
                %v327 = vld [vmem:[%s301 + $0x60] sm:$0xf]
                %328 = vst [vmem:[%s302 + $0x30] sm:$0xf] %v327
                %v329 = vld [vmem:[%s301 + $0x64] sm:$0xf]
                %330 = vst [vmem:[%s302 + $0x34] sm:$0xf] %v329
                %v331 = vld [vmem:[%s301 + $0x68] sm:$0xf]
                %332 = vst [vmem:[%s302 + $0x38] sm:$0xf] %v331
                %v333 = vld [vmem:[%s301 + $0x6c] sm:$0xf]
                %334 = vst [vmem:[%s302 + $0x3c] sm:$0xf] %v333
              $region69: #{tpu_custom_call.1} parent=63 // loop_footer
                %s300 = sadd.s32 1, %s296
              $region70: #{tpu_custom_call.1} parent=63 // loop_footer_branch
                %295 = sbr.rel target = $region66
              $region71: #{tpu_custom_call.1} parent=63 // loop_exit
                _
            $region64: #{tpu_custom_call.1} parent=55 // pred_fallthru
              _
          $region56: #{tpu_custom_call.1} parent=51 // pred_fallthru
            _
          %386 = vnop
        $region52: #{tpu_custom_call.1} parent=47 // pred_fallthru
          _
      $region48: #{tpu_custom_call.1} parent=5 // pred_fallthru
        _
      %p387 = scmp.le.s32.totalorder 1, %s15
      %p388 = scmp.lt.s32.totalorder %s15, 3
      %p389 = pnand %p387, %p388
      %p390 = pneg %p389
      // Predicated region
      $region90: #{tpu_custom_call.1} parent=5 // pred_check
        _
      $region91: #{tpu_custom_call.1} parent=5 // pred_check_branch
        %392 = sbr.rel (%p389) target = $region93
      $region92: #{tpu_custom_call.1} parent=5 // pred_region
        %s393 = ssub.s32 %s15, 1
        %s394 = sand.u32 %s28, 1
        %s395 = sand.u32 %s28, 1
        %s396 = smul.addr %s395, 64
        %s397 = scalar_lea.vmem [#allocation2], %s396
        // Predicated region
        $region94: #{tpu_custom_call.1} parent=92 // pred_check
          %p398 = pneg %p41
        $region95: #{tpu_custom_call.1} parent=92 // pred_check_branch
          %400 = sbr.rel (%p398) target = $region97
        $region96: #{tpu_custom_call.1} parent=92 // pred_region
          _
        $region97: #{tpu_custom_call.1} parent=92 // pred_fallthru
          _
        %s401 = sand.u32 %s28, 1
        %s402 = sand.u32 %s28, 1
        %s403 = smul.addr %s402, 64
        %s404 = scalar_lea.vmem [#allocation2], %s403
        %p405 = pneg %p41
        %p406 = pneg %p38
        %p407 = pneg %p62
        %p408 = pneg %p59
        %p409 = pneg %p83
        %p410 = pneg %p80
        %p411 = pneg %p104
        %p412 = pneg %p101
        %p413 = pneg %p125
        %p414 = pneg %p122
        %p415 = pneg %p146
        %p416 = pneg %p143
        %p417 = pneg %p167
        %p418 = pneg %p164
        %p419 = pneg %p188
        %p420 = pneg %p185
        %p421 = pneg %p209
        %p422 = pneg %p206
        %p423 = pneg %p235
        %p424 = pneg %p232
        %s425 = smul.u32 4, %s20
        %p426 = scmp.lt.s32.totalorder %s425, 7
        %s427 = scalar_select %p426, %s425, 7
        %s428 = smul.addr %s427, 8
        %s429 = scalar_lea.vmem %s9, %s428
        %s430 = smul.u32 4, %s20
        %s431 = smul.u32 4, %s20
        %p432 = scmp.lt.s32.totalorder %s431, 7
        %s433 = scalar_select %p432, %s431, 7
        %s434 = smul.addr %s433, 8
        %s435 = scalar_lea.vmem %s9, %s434
        %s436 = smul.u32 4, %s20
        %v438 = vld [vmem:[%s397] sm:$0xf]
        %v439 = vld [vmem:[%s397 + $0x4] sm:$0xf]
        %v440 = vld [vmem:[%s397 + $0x8] sm:$0xf]
        %v441 = vld [vmem:[%s397 + $0xc] sm:$0xf]
        %v442 = vld [vmem:[%s397 + $0x10] sm:$0xf]
        %v443 = vld [vmem:[%s397 + $0x14] sm:$0xf]
        %v444 = vld [vmem:[%s397 + $0x18] sm:$0xf]
        %v445 = vld [vmem:[%s397 + $0x1c] sm:$0xf]
        %v446 = vld [vmem:[%s397 + $0x20] sm:$0xf]
        %v447 = vld [vmem:[%s397 + $0x24] sm:$0xf]
        %v448 = vld [vmem:[%s397 + $0x28] sm:$0xf]
        %v449 = vld [vmem:[%s397 + $0x2c] sm:$0xf]
        %v450 = vld [vmem:[%s397 + $0x30] sm:$0xf]
        %v451 = vld [vmem:[%s397 + $0x34] sm:$0xf]
        %v452 = vld [vmem:[%s397 + $0x38] sm:$0xf]
        %v453 = vld [vmem:[%s397 + $0x3c] sm:$0xf]
        %v454 = vld [vmem:[%s1] sm:$0x3]
        %v455 = vld [vmem:[%s2] sm:$0x1]
        %v457 = vlaneseq
        %v458 = vshrl.u32 %v457, 7
        %v459 = vsub.s32 0, %v458
        %v460 = vrot.slane %v455, %v459
        %v478 = vunpack.c.l.b16 %v438
        %v479 = vunpack.c.l.b16 %v439
        %v480 = vunpack.c.l.b16 %v440
        %v481 = vunpack.c.l.b16 %v441
        %v482 = vunpack.c.l.b16 %v442
        %v483 = vunpack.c.l.b16 %v443
        %v484 = vunpack.c.l.b16 %v444
        %v485 = vunpack.c.l.b16 %v445
        %v486 = vunpack.c.l.b16 %v446
        %v487 = vunpack.c.l.b16 %v447
        %v488 = vunpack.c.l.b16 %v448
        %v489 = vunpack.c.l.b16 %v449
        %v490 = vunpack.c.l.b16 %v450
        %v491 = vunpack.c.l.b16 %v451
        %v492 = vunpack.c.l.b16 %v452
        %v493 = vunpack.c.l.b16 %v453
        %v494 = vpack.c.b16 %v479, %v478
        %v495 = vpack.c.b16 %v481, %v480
        %v496 = vpack.c.b16 %v483, %v482
        %v497 = vpack.c.b16 %v485, %v484
        %v498 = vpack.c.b16 %v487, %v486
        %v499 = vpack.c.b16 %v489, %v488
        %v500 = vpack.c.b16 %v491, %v490
        %v501 = vpack.c.b16 %v493, %v492
        %vm502 = vcmask 31744
        %v504 = vsel %vm502, %v494, 0
        %v507 = vsel %vm502, %v495, 0
        %v510 = vsel %vm502, %v496, 0
        %v513 = vsel %vm502, %v497, 0
        %v516 = vsel %vm502, %v498, 0
        %v519 = vsel %vm502, %v499, 0
        %v522 = vsel %vm502, %v500, 0
        %v525 = vsel %vm502, %v501, 0
        %vm527 = vcmask 1041408
        %v529 = vsel %vm527, %v454, 0
        %531 = vmatprep.subr.bf16.mxu0 0
        %532 = vmatpush1.bf16.msra.mxu0 %v529
        %533 = vmatprep.subr.bf16.mxu0 0
        %534 = vmatpush1.bf16.msra.mxu0 0
        %535 = vmatprep.subr.bf16.mxu0 0
        %536 = vmatpush1.bf16.msra.mxu0 0
        %537 = vmatprep.subr.bf16.mxu0 0
        %538 = vmatpush1.bf16.msra.mxu0 0
        %539 = vmatprep.subr.bf16.mxu0 0
        %540 = vmatpush1.bf16.msra.mxu0 0
        %541 = vmatprep.subr.bf16.mxu0 0
        %542 = vmatpush1.bf16.msra.mxu0 0
        %543 = vmatprep.subr.bf16.mxu0 0
        %544 = vmatpush1.bf16.msra.mxu0 0
        %545 = vmatprep.subr.bf16.mxu0 0
        %546 = vmatpush1.bf16.msra.mxu0 0
        %547 = vmatprep.subr.bf16.mxu0 0
        %548 = vmatpush1.bf16.msra.mxu0 0
        %549 = vmatprep.subr.bf16.mxu0 0
        %550 = vmatpush1.bf16.msra.mxu0 0
        %551 = vmatprep.subr.bf16.mxu0 0
        %552 = vmatpush1.bf16.msra.mxu0 0
        %553 = vmatprep.subr.bf16.mxu0 0
        %554 = vmatpush1.bf16.msra.mxu0 0
        %555 = vmatprep.subr.bf16.mxu0 0
        %556 = vmatpush1.bf16.msra.mxu0 0
        %557 = vmatprep.subr.bf16.mxu0 0
        %558 = vmatpush1.bf16.msra.mxu0 0
        %559 = vmatprep.subr.bf16.mxu0 0
        %560 = vmatpush1.bf16.msra.mxu0 0
        %561 = vmatprep.subr.bf16.mxu0 0
        %562 = vmatpush1.bf16.msra.mxu0 0
        %563 = vmatprep.mubr.bf16.mxu0 0
        %564 = vmatmul.mubr.bf16.gmra.mrb[0].mxu0 %v504
        %v565 = vpop.f32.mrb[0].mxu0
        %v566 = vadd.f32 %v460, %v565
        %v567 = vpop.f32.mrb[0].mxu0
        %v568 = vpop.f32.mrb[0].mxu0
        %v569 = vadd.f32 %v460, %v568
        %v570 = vpop.f32.mrb[0].mxu0
        %571 = vmatprep.mubr.bf16.mxu0 0
        %572 = vmatmul.mubr.bf16.gmra.mrb[0].mxu0 %v507
        %v573 = vpop.f32.mrb[0].mxu0
        %v574 = vadd.f32 %v460, %v573
        %v575 = vpop.f32.mrb[0].mxu0
        %v576 = vpop.f32.mrb[0].mxu0
        %v577 = vadd.f32 %v460, %v576
        %v578 = vpop.f32.mrb[0].mxu0
        %579 = vmatprep.mubr.bf16.mxu0 0
        %580 = vmatmul.mubr.bf16.gmra.mrb[0].mxu0 %v510
        %v581 = vpop.f32.mrb[0].mxu0
        %v582 = vadd.f32 %v460, %v581
        %v583 = vpop.f32.mrb[0].mxu0
        %v584 = vpop.f32.mrb[0].mxu0
        %v585 = vadd.f32 %v460, %v584
        %v586 = vpop.f32.mrb[0].mxu0
        %587 = vmatprep.mubr.bf16.mxu0 0
        %588 = vmatmul.mubr.bf16.gmra.mrb[0].mxu0 %v513
        %v589 = vpop.f32.mrb[0].mxu0
        %v590 = vadd.f32 %v460, %v589
        %v591 = vpop.f32.mrb[0].mxu0
        %v592 = vpop.f32.mrb[0].mxu0
        %v593 = vadd.f32 %v460, %v592
        %v594 = vpop.f32.mrb[0].mxu0
        %595 = vmatprep.mubr.bf16.mxu0 0
        %596 = vmatmul.mubr.bf16.gmra.mrb[0].mxu0 %v516
        %v597 = vpop.f32.mrb[0].mxu0
        %v598 = vadd.f32 %v460, %v597
        %v599 = vpop.f32.mrb[0].mxu0
        %v600 = vpop.f32.mrb[0].mxu0
        %v601 = vadd.f32 %v460, %v600
        %v602 = vpop.f32.mrb[0].mxu0
        %603 = vmatprep.mubr.bf16.mxu0 0
        %604 = vmatmul.mubr.bf16.gmra.mrb[0].mxu0 %v519
        %v605 = vpop.f32.mrb[0].mxu0
        %v606 = vadd.f32 %v460, %v605
        %v607 = vpop.f32.mrb[0].mxu0
        %v608 = vpop.f32.mrb[0].mxu0
        %v609 = vadd.f32 %v460, %v608
        %v610 = vpop.f32.mrb[0].mxu0
        %611 = vmatprep.mubr.bf16.mxu0 0
        %612 = vmatmul.mubr.bf16.gmra.mrb[0].mxu0 %v522
        %v613 = vpop.f32.mrb[0].mxu0
        %v614 = vadd.f32 %v460, %v613
        %v615 = vpop.f32.mrb[0].mxu0
        %v616 = vpop.f32.mrb[0].mxu0
        %v617 = vadd.f32 %v460, %v616
        %v618 = vpop.f32.mrb[0].mxu0
        %619 = vmatprep.mubr.bf16.mxu0 0
        %620 = vmatmul.mubr.bf16.gmra.mrb[0].mxu0 %v525
        %v621 = vpop.f32.mrb[0].mxu0
        %v622 = vadd.f32 %v460, %v621
        %v623 = vpop.f32.mrb[0].mxu0
        %v624 = vpop.f32.mrb[0].mxu0
        %v625 = vadd.f32 %v460, %v624
        %v626 = vpop.f32.mrb[0].mxu0
        %627 = vdwg.mxu0
        %v628 = vmax.f32 %v566, 0.0
        %v629 = vmax.f32 %v569, 0.0
        %v630 = vmax.f32 %v574, 0.0
        %v631 = vmax.f32 %v577, 0.0
        %v632 = vmax.f32 %v582, 0.0
        %v633 = vmax.f32 %v585, 0.0
        %v634 = vmax.f32 %v590, 0.0
        %v635 = vmax.f32 %v593, 0.0
        %v636 = vmax.f32 %v598, 0.0
        %v637 = vmax.f32 %v601, 0.0
        %v638 = vmax.f32 %v606, 0.0
        %v639 = vmax.f32 %v609, 0.0
        %v640 = vmax.f32 %v614, 0.0
        %v641 = vmax.f32 %v617, 0.0
        %v642 = vmax.f32 %v622, 0.0
        %v643 = vmax.f32 %v625, 0.0
        %v644 = vpack.c.bf16 %v629, %v628
        %v645 = vpack.c.bf16 %v631, %v630
        %v646 = vpack.c.bf16 %v633, %v632
        %v647 = vpack.c.bf16 %v635, %v634
        %v648 = vpack.c.bf16 %v637, %v636
        %v649 = vpack.c.bf16 %v639, %v638
        %v650 = vpack.c.bf16 %v641, %v640
        %v651 = vpack.c.bf16 %v643, %v642
        %v652 = vld [vmem:[%s3] sm:$0xf]
        %v653 = vld [vmem:[%s3 + $0x4] sm:$0xf]
        %v654 = vld [vmem:[%s3 + $0x8] sm:$0xf]
        %v655 = vld [vmem:[%s3 + $0xc] sm:$0xf]
        %vm656 = vcmask 64512
        %v658 = vsel %vm656, %v646, 0
        %v661 = vsel %vm656, %v647, 0
        %vm663 = vcmask 1043456
        %v665 = vsel %vm663, %v653, 0
        %667 = vmatprep.subr.bf16.mxu0 0
        %668 = vmatpush1.bf16.msra.mxu0 %v665
        %669 = vmatprep.subr.bf16.mxu0 0
        %670 = vmatpush1.bf16.msra.mxu0 0
        %671 = vmatprep.subr.bf16.mxu0 0
        %672 = vmatpush1.bf16.msra.mxu0 0
        %673 = vmatprep.subr.bf16.mxu0 0
        %674 = vmatpush1.bf16.msra.mxu0 0
        %675 = vmatprep.subr.bf16.mxu0 0
        %676 = vmatpush1.bf16.msra.mxu0 0
        %677 = vmatprep.subr.bf16.mxu0 0
        %678 = vmatpush1.bf16.msra.mxu0 0
        %679 = vmatprep.subr.bf16.mxu0 0
        %680 = vmatpush1.bf16.msra.mxu0 0
        %681 = vmatprep.subr.bf16.mxu0 0
        %682 = vmatpush1.bf16.msra.mxu0 0
        %683 = vmatprep.subr.bf16.mxu0 0
        %684 = vmatpush1.bf16.msra.mxu0 0
        %685 = vmatprep.subr.bf16.mxu0 0
        %686 = vmatpush1.bf16.msra.mxu0 0
        %687 = vmatprep.subr.bf16.mxu0 0
        %688 = vmatpush1.bf16.msra.mxu0 0
        %689 = vmatprep.subr.bf16.mxu0 0
        %690 = vmatpush1.bf16.msra.mxu0 0
        %691 = vmatprep.subr.bf16.mxu0 0
        %692 = vmatpush1.bf16.msra.mxu0 0
        %693 = vmatprep.subr.bf16.mxu0 0
        %694 = vmatpush1.bf16.msra.mxu0 0
        %695 = vmatprep.subr.bf16.mxu0 0
        %696 = vmatpush1.bf16.msra.mxu0 0
        %697 = vmatprep.subr.bf16.mxu0 0
        %698 = vmatpush1.bf16.msra.mxu0 0
        %699 = vmatprep.mubr.bf16.mxu0 0
        %700 = vmatmul.mubr.bf16.gmra.mrb[0].mxu0 %v658
        %v701 = vpop.f32.mrb[0].mxu0
        %v702 = vadd.f32 0.0, %v701
        %v703 = vpop.f32.mrb[0].mxu0
        %v704 = vpop.f32.mrb[0].mxu0
        %v705 = vadd.f32 0.0, %v704
        %v706 = vpop.f32.mrb[0].mxu0
        %707 = vmatprep.mubr.bf16.mxu0 0
        %708 = vmatmul.mubr.bf16.gmra.mrb[0].mxu0 %v661
        %v709 = vpop.f32.mrb[0].mxu0
        %v710 = vadd.f32 0.0, %v709
        %v711 = vpop.f32.mrb[0].mxu0
        %v712 = vpop.f32.mrb[0].mxu0
        %v713 = vadd.f32 0.0, %v712
        %v714 = vpop.f32.mrb[0].mxu0
        %715 = vdwg.mxu0
        %v717 = vsel %vm656, %v644, 0
        %v720 = vsel %vm656, %v645, 0
        %v723 = vsel %vm663, %v652, 0
        %725 = vmatprep.subr.bf16.mxu0 0
        %726 = vmatpush1.bf16.msra.mxu0 %v723
        %727 = vmatprep.subr.bf16.mxu0 0
        %728 = vmatpush1.bf16.msra.mxu0 0
        %729 = vmatprep.subr.bf16.mxu0 0
        %730 = vmatpush1.bf16.msra.mxu0 0
        %731 = vmatprep.subr.bf16.mxu0 0
        %732 = vmatpush1.bf16.msra.mxu0 0
        %733 = vmatprep.subr.bf16.mxu0 0
        %734 = vmatpush1.bf16.msra.mxu0 0
        %735 = vmatprep.subr.bf16.mxu0 0
        %736 = vmatpush1.bf16.msra.mxu0 0
        %737 = vmatprep.subr.bf16.mxu0 0
        %738 = vmatpush1.bf16.msra.mxu0 0
        %739 = vmatprep.subr.bf16.mxu0 0
        %740 = vmatpush1.bf16.msra.mxu0 0
        %741 = vmatprep.subr.bf16.mxu0 0
        %742 = vmatpush1.bf16.msra.mxu0 0
        %743 = vmatprep.subr.bf16.mxu0 0
        %744 = vmatpush1.bf16.msra.mxu0 0
        %745 = vmatprep.subr.bf16.mxu0 0
        %746 = vmatpush1.bf16.msra.mxu0 0
        %747 = vmatprep.subr.bf16.mxu0 0
        %748 = vmatpush1.bf16.msra.mxu0 0
        %749 = vmatprep.subr.bf16.mxu0 0
        %750 = vmatpush1.bf16.msra.mxu0 0
        %751 = vmatprep.subr.bf16.mxu0 0
        %752 = vmatpush1.bf16.msra.mxu0 0
        %753 = vmatprep.subr.bf16.mxu0 0
        %754 = vmatpush1.bf16.msra.mxu0 0
        %755 = vmatprep.subr.bf16.mxu0 0
        %756 = vmatpush1.bf16.msra.mxu0 0
        %757 = vmatprep.mubr.bf16.mxu0 0
        %758 = vmatmul.mubr.bf16.gmra.mrb[0].mxu0 %v717
        %v759 = vpop.f32.mrb[0].mxu0
        %v760 = vadd.f32 %v702, %v759
        %v761 = vpop.f32.mrb[0].mxu0
        %v762 = vpop.f32.mrb[0].mxu0
        %v763 = vadd.f32 %v705, %v762
        %v764 = vpop.f32.mrb[0].mxu0
        %765 = vmatprep.mubr.bf16.mxu0 0
        %766 = vmatmul.mubr.bf16.gmra.mrb[0].mxu0 %v720
        %v767 = vpop.f32.mrb[0].mxu0
        %v768 = vadd.f32 %v710, %v767
        %v769 = vpop.f32.mrb[0].mxu0
        %v770 = vpop.f32.mrb[0].mxu0
        %v771 = vadd.f32 %v713, %v770
        %v772 = vpop.f32.mrb[0].mxu0
        %773 = vdwg.mxu0
        %v775 = vsel %vm656, %v648, 0
        %v778 = vsel %vm656, %v649, 0
        %v781 = vsel %vm663, %v654, 0
        %783 = vmatprep.subr.bf16.mxu0 0
        %784 = vmatpush1.bf16.msra.mxu0 %v781
        %785 = vmatprep.subr.bf16.mxu0 0
        %786 = vmatpush1.bf16.msra.mxu0 0
        %787 = vmatprep.subr.bf16.mxu0 0
        %788 = vmatpush1.bf16.msra.mxu0 0
        %789 = vmatprep.subr.bf16.mxu0 0
        %790 = vmatpush1.bf16.msra.mxu0 0
        %791 = vmatprep.subr.bf16.mxu0 0
        %792 = vmatpush1.bf16.msra.mxu0 0
        %793 = vmatprep.subr.bf16.mxu0 0
        %794 = vmatpush1.bf16.msra.mxu0 0
        %795 = vmatprep.subr.bf16.mxu0 0
        %796 = vmatpush1.bf16.msra.mxu0 0
        %797 = vmatprep.subr.bf16.mxu0 0
        %798 = vmatpush1.bf16.msra.mxu0 0
        %799 = vmatprep.subr.bf16.mxu0 0
        %800 = vmatpush1.bf16.msra.mxu0 0
        %801 = vmatprep.subr.bf16.mxu0 0
        %802 = vmatpush1.bf16.msra.mxu0 0
        %803 = vmatprep.subr.bf16.mxu0 0
        %804 = vmatpush1.bf16.msra.mxu0 0
        %805 = vmatprep.subr.bf16.mxu0 0
        %806 = vmatpush1.bf16.msra.mxu0 0
        %807 = vmatprep.subr.bf16.mxu0 0
        %808 = vmatpush1.bf16.msra.mxu0 0
        %809 = vmatprep.subr.bf16.mxu0 0
        %810 = vmatpush1.bf16.msra.mxu0 0
        %811 = vmatprep.subr.bf16.mxu0 0
        %812 = vmatpush1.bf16.msra.mxu0 0
        %813 = vmatprep.subr.bf16.mxu0 0
        %814 = vmatpush1.bf16.msra.mxu0 0
        %815 = vmatprep.mubr.bf16.mxu0 0
        %816 = vmatmul.mubr.bf16.gmra.mrb[0].mxu0 %v775
        %v817 = vpop.f32.mrb[0].mxu0
        %v818 = vadd.f32 0.0, %v817
        %v819 = vpop.f32.mrb[0].mxu0
        %v820 = vpop.f32.mrb[0].mxu0
        %v821 = vadd.f32 0.0, %v820
        %v822 = vpop.f32.mrb[0].mxu0
        %823 = vmatprep.mubr.bf16.mxu0 0
        %824 = vmatmul.mubr.bf16.gmra.mrb[0].mxu0 %v778
        %v825 = vpop.f32.mrb[0].mxu0
        %v826 = vadd.f32 0.0, %v825
        %v827 = vpop.f32.mrb[0].mxu0
        %v828 = vpop.f32.mrb[0].mxu0
        %v829 = vadd.f32 0.0, %v828
        %v830 = vpop.f32.mrb[0].mxu0
        %831 = vdwg.mxu0
        %v832 = vadd.f32 %v760, %v818
        %v833 = vadd.f32 %v763, %v821
        %v834 = vadd.f32 %v768, %v826
        %v835 = vadd.f32 %v771, %v829
        %v837 = vsel %vm656, %v650, 0
        %v840 = vsel %vm656, %v651, 0
        %v843 = vsel %vm663, %v655, 0
        %845 = vmatprep.subr.bf16.mxu0 0
        %846 = vmatpush1.bf16.msra.mxu0 %v843
        %847 = vmatprep.subr.bf16.mxu0 0
        %848 = vmatpush1.bf16.msra.mxu0 0
        %849 = vmatprep.subr.bf16.mxu0 0
        %850 = vmatpush1.bf16.msra.mxu0 0
        %851 = vmatprep.subr.bf16.mxu0 0
        %852 = vmatpush1.bf16.msra.mxu0 0
        %853 = vmatprep.subr.bf16.mxu0 0
        %854 = vmatpush1.bf16.msra.mxu0 0
        %855 = vmatprep.subr.bf16.mxu0 0
        %856 = vmatpush1.bf16.msra.mxu0 0
        %857 = vmatprep.subr.bf16.mxu0 0
        %858 = vmatpush1.bf16.msra.mxu0 0
        %859 = vmatprep.subr.bf16.mxu0 0
        %860 = vmatpush1.bf16.msra.mxu0 0
        %861 = vmatprep.subr.bf16.mxu0 0
        %862 = vmatpush1.bf16.msra.mxu0 0
        %863 = vmatprep.subr.bf16.mxu0 0
        %864 = vmatpush1.bf16.msra.mxu0 0
        %865 = vmatprep.subr.bf16.mxu0 0
        %866 = vmatpush1.bf16.msra.mxu0 0
        %867 = vmatprep.subr.bf16.mxu0 0
        %868 = vmatpush1.bf16.msra.mxu0 0
        %869 = vmatprep.subr.bf16.mxu0 0
        %870 = vmatpush1.bf16.msra.mxu0 0
        %871 = vmatprep.subr.bf16.mxu0 0
        %872 = vmatpush1.bf16.msra.mxu0 0
        %873 = vmatprep.subr.bf16.mxu0 0
        %874 = vmatpush1.bf16.msra.mxu0 0
        %875 = vmatprep.subr.bf16.mxu0 0
        %876 = vmatpush1.bf16.msra.mxu0 0
        %877 = vmatprep.mubr.bf16.mxu0 0
        %878 = vmatmul.mubr.bf16.gmra.mrb[0].mxu0 %v837
        %v879 = vpop.f32.mrb[0].mxu0
        %v880 = vadd.f32 0.0, %v879
        %v881 = vpop.f32.mrb[0].mxu0
        %v882 = vpop.f32.mrb[0].mxu0
        %v883 = vadd.f32 0.0, %v882
        %v884 = vpop.f32.mrb[0].mxu0
        %885 = vmatprep.mubr.bf16.mxu0 0
        %886 = vmatmul.mubr.bf16.gmra.mrb[0].mxu0 %v840
        %v887 = vpop.f32.mrb[0].mxu0
        %v888 = vadd.f32 0.0, %v887
        %v889 = vpop.f32.mrb[0].mxu0
        %v890 = vpop.f32.mrb[0].mxu0
        %v891 = vadd.f32 0.0, %v890
        %v892 = vpop.f32.mrb[0].mxu0
        %893 = vdwg.mxu0
        %v894 = vadd.f32 %v832, %v880
        %v895 = vadd.f32 %v833, %v883
        %v896 = vadd.f32 %v834, %v888
        %v897 = vadd.f32 %v835, %v891
        %898 = vmatprep.subr.bf16.mxu0 0
        %899 = vmatpush1.bf16.msra.mxu0 %v665
        %900 = vmatprep.subr.bf16.mxu0 0
        %901 = vmatpush1.bf16.msra.mxu0 0
        %902 = vmatprep.subr.bf16.mxu0 0
        %903 = vmatpush1.bf16.msra.mxu0 0
        %904 = vmatprep.subr.bf16.mxu0 0
        %905 = vmatpush1.bf16.msra.mxu0 0
        %906 = vmatprep.subr.bf16.mxu0 0
        %907 = vmatpush1.bf16.msra.mxu0 0
        %908 = vmatprep.subr.bf16.mxu0 0
        %909 = vmatpush1.bf16.msra.mxu0 0
        %910 = vmatprep.subr.bf16.mxu0 0
        %911 = vmatpush1.bf16.msra.mxu0 0
        %912 = vmatprep.subr.bf16.mxu0 0
        %913 = vmatpush1.bf16.msra.mxu0 0
        %914 = vmatprep.subr.bf16.mxu0 0
        %915 = vmatpush1.bf16.msra.mxu0 0
        %916 = vmatprep.subr.bf16.mxu0 0
        %917 = vmatpush1.bf16.msra.mxu0 0
        %918 = vmatprep.subr.bf16.mxu0 0
        %919 = vmatpush1.bf16.msra.mxu0 0
        %920 = vmatprep.subr.bf16.mxu0 0
        %921 = vmatpush1.bf16.msra.mxu0 0
        %922 = vmatprep.subr.bf16.mxu0 0
        %923 = vmatpush1.bf16.msra.mxu0 0
        %924 = vmatprep.subr.bf16.mxu0 0
        %925 = vmatpush1.bf16.msra.mxu0 0
        %926 = vmatprep.subr.bf16.mxu0 0
        %927 = vmatpush1.bf16.msra.mxu0 0
        %928 = vmatprep.subr.bf16.mxu0 0
        %929 = vmatpush1.bf16.msra.mxu0 0
        %930 = vmatprep.mubr.bf16.mxu0 0
        %931 = vmatmul.mubr.bf16.gmra.mrb[0].mxu0 %v837
        %v932 = vpop.f32.mrb[0].mxu0
        %v933 = vadd.f32 0.0, %v932
        %v934 = vpop.f32.mrb[0].mxu0
        %v935 = vpop.f32.mrb[0].mxu0
        %v936 = vadd.f32 0.0, %v935
        %v937 = vpop.f32.mrb[0].mxu0
        %938 = vmatprep.mubr.bf16.mxu0 0
        %939 = vmatmul.mubr.bf16.gmra.mrb[0].mxu0 %v840
        %v940 = vpop.f32.mrb[0].mxu0
        %v941 = vadd.f32 0.0, %v940
        %v942 = vpop.f32.mrb[0].mxu0
        %v943 = vpop.f32.mrb[0].mxu0
        %v944 = vadd.f32 0.0, %v943
        %v945 = vpop.f32.mrb[0].mxu0
        %946 = vdwg.mxu0
        %947 = vmatprep.subr.bf16.mxu0 0
        %948 = vmatpush1.bf16.msra.mxu0 %v723
        %949 = vmatprep.subr.bf16.mxu0 0
        %950 = vmatpush1.bf16.msra.mxu0 0
        %951 = vmatprep.subr.bf16.mxu0 0
        %952 = vmatpush1.bf16.msra.mxu0 0
        %953 = vmatprep.subr.bf16.mxu0 0
        %954 = vmatpush1.bf16.msra.mxu0 0
        %955 = vmatprep.subr.bf16.mxu0 0
        %956 = vmatpush1.bf16.msra.mxu0 0
        %957 = vmatprep.subr.bf16.mxu0 0
        %958 = vmatpush1.bf16.msra.mxu0 0
        %959 = vmatprep.subr.bf16.mxu0 0
        %960 = vmatpush1.bf16.msra.mxu0 0
        %961 = vmatprep.subr.bf16.mxu0 0
        %962 = vmatpush1.bf16.msra.mxu0 0
        %963 = vmatprep.subr.bf16.mxu0 0
        %964 = vmatpush1.bf16.msra.mxu0 0
        %965 = vmatprep.subr.bf16.mxu0 0
        %966 = vmatpush1.bf16.msra.mxu0 0
        %967 = vmatprep.subr.bf16.mxu0 0
        %968 = vmatpush1.bf16.msra.mxu0 0
        %969 = vmatprep.subr.bf16.mxu0 0
        %970 = vmatpush1.bf16.msra.mxu0 0
        %971 = vmatprep.subr.bf16.mxu0 0
        %972 = vmatpush1.bf16.msra.mxu0 0
        %973 = vmatprep.subr.bf16.mxu0 0
        %974 = vmatpush1.bf16.msra.mxu0 0
        %975 = vmatprep.subr.bf16.mxu0 0
        %976 = vmatpush1.bf16.msra.mxu0 0
        %977 = vmatprep.subr.bf16.mxu0 0
        %978 = vmatpush1.bf16.msra.mxu0 0
        %979 = vmatprep.mubr.bf16.mxu0 0
        %980 = vmatmul.mubr.bf16.gmra.mrb[0].mxu0 %v775
        %v981 = vpop.f32.mrb[0].mxu0
        %v982 = vadd.f32 %v933, %v981
        %v983 = vpop.f32.mrb[0].mxu0
        %v984 = vpop.f32.mrb[0].mxu0
        %v985 = vadd.f32 %v936, %v984
        %v986 = vpop.f32.mrb[0].mxu0
        %987 = vmatprep.mubr.bf16.mxu0 0
        %988 = vmatmul.mubr.bf16.gmra.mrb[0].mxu0 %v778
        %v989 = vpop.f32.mrb[0].mxu0
        %v990 = vadd.f32 %v941, %v989
        %v991 = vpop.f32.mrb[0].mxu0
        %v992 = vpop.f32.mrb[0].mxu0
        %v993 = vadd.f32 %v944, %v992
        %v994 = vpop.f32.mrb[0].mxu0
        %995 = vdwg.mxu0
        %vm996 = vsmask.f32 7424
        %v997 = vshrl.u32 %v644, 16
        %v999 = vshll.u32 %v644, 16
        %v1001 = vrot.slane %v999, 1
        %v1002 = vor.u32 %v997, %v1001
        %v1003 = vshll.u32 %v645, 16
        %v1005 = vrot.slane %v1003, 1
        %v1006 = vsel %vm996, %v1002, %v1005
        %v1007 = vshrl.u32 %v645, 16
        %v1009 = vor.u32 %v1007, %v1005
        %vm1012 = vcmask 1047552
        %vm1013 = vmand %vm1012, %vm996
        %v1014 = vsel %vm1013, %v1009, %v1001
        %v1016 = vsel %vm656, %v1006, 0
        %v1019 = vsel %vm656, %v1014, 0
        %1021 = vmatprep.subr.bf16.mxu0 0
        %1022 = vmatpush1.bf16.msra.mxu0 %v781
        %1023 = vmatprep.subr.bf16.mxu0 0
        %1024 = vmatpush1.bf16.msra.mxu0 0
        %1025 = vmatprep.subr.bf16.mxu0 0
        %1026 = vmatpush1.bf16.msra.mxu0 0
        %1027 = vmatprep.subr.bf16.mxu0 0
        %1028 = vmatpush1.bf16.msra.mxu0 0
        %1029 = vmatprep.subr.bf16.mxu0 0
        %1030 = vmatpush1.bf16.msra.mxu0 0
        %1031 = vmatprep.subr.bf16.mxu0 0
        %1032 = vmatpush1.bf16.msra.mxu0 0
        %1033 = vmatprep.subr.bf16.mxu0 0
        %1034 = vmatpush1.bf16.msra.mxu0 0
        %1035 = vmatprep.subr.bf16.mxu0 0
        %1036 = vmatpush1.bf16.msra.mxu0 0
        %1037 = vmatprep.subr.bf16.mxu0 0
        %1038 = vmatpush1.bf16.msra.mxu0 0
        %1039 = vmatprep.subr.bf16.mxu0 0
        %1040 = vmatpush1.bf16.msra.mxu0 0
        %1041 = vmatprep.subr.bf16.mxu0 0
        %1042 = vmatpush1.bf16.msra.mxu0 0
        %1043 = vmatprep.subr.bf16.mxu0 0
        %1044 = vmatpush1.bf16.msra.mxu0 0
        %1045 = vmatprep.subr.bf16.mxu0 0
        %1046 = vmatpush1.bf16.msra.mxu0 0
        %1047 = vmatprep.subr.bf16.mxu0 0
        %1048 = vmatpush1.bf16.msra.mxu0 0
        %1049 = vmatprep.subr.bf16.mxu0 0
        %1050 = vmatpush1.bf16.msra.mxu0 0
        %1051 = vmatprep.subr.bf16.mxu0 0
        %1052 = vmatpush1.bf16.msra.mxu0 0
        %1053 = vmatprep.mubr.bf16.mxu0 0
        %1054 = vmatmul.mubr.bf16.gmra.mrb[0].mxu0 %v1016
        %v1055 = vpop.f32.mrb[0].mxu0
        %v1056 = vadd.f32 0.0, %v1055
        %v1057 = vpop.f32.mrb[0].mxu0
        %v1058 = vpop.f32.mrb[0].mxu0
        %v1059 = vadd.f32 0.0, %v1058
        %v1060 = vpop.f32.mrb[0].mxu0
        %1061 = vmatprep.mubr.bf16.mxu0 0
        %1062 = vmatmul.mubr.bf16.gmra.mrb[0].mxu0 %v1019
        %v1063 = vpop.f32.mrb[0].mxu0
        %v1064 = vadd.f32 0.0, %v1063
        %v1065 = vpop.f32.mrb[0].mxu0
        %v1066 = vpop.f32.mrb[0].mxu0
        %v1067 = vadd.f32 0.0, %v1066
        %v1068 = vpop.f32.mrb[0].mxu0
        %1069 = vdwg.mxu0
        %v1070 = vadd.f32 %v982, %v1056
        %v1071 = vadd.f32 %v985, %v1059
        %v1072 = vadd.f32 %v990, %v1064
        %v1073 = vadd.f32 %v993, %v1067
        %v1074 = vshrl.u32 %v646, 16
        %v1076 = vshll.u32 %v646, 16
        %v1078 = vrot.slane %v1076, 1
        %v1079 = vor.u32 %v1074, %v1078
        %v1080 = vshll.u32 %v647, 16
        %v1082 = vrot.slane %v1080, 1
        %v1083 = vsel %vm996, %v1079, %v1082
        %v1084 = vshrl.u32 %v647, 16
        %v1086 = vor.u32 %v1084, %v1082
        %v1089 = vsel %vm1013, %v1086, %v1078
        %v1091 = vsel %vm656, %v1083, 0
        %v1094 = vsel %vm656, %v1089, 0
        %1096 = vmatprep.subr.bf16.mxu0 0
        %1097 = vmatpush1.bf16.msra.mxu0 %v843
        %1098 = vmatprep.subr.bf16.mxu0 0
        %1099 = vmatpush1.bf16.msra.mxu0 0
        %1100 = vmatprep.subr.bf16.mxu0 0
        %1101 = vmatpush1.bf16.msra.mxu0 0
        %1102 = vmatprep.subr.bf16.mxu0 0
        %1103 = vmatpush1.bf16.msra.mxu0 0
        %1104 = vmatprep.subr.bf16.mxu0 0
        %1105 = vmatpush1.bf16.msra.mxu0 0
        %1106 = vmatprep.subr.bf16.mxu0 0
        %1107 = vmatpush1.bf16.msra.mxu0 0
        %1108 = vmatprep.subr.bf16.mxu0 0
        %1109 = vmatpush1.bf16.msra.mxu0 0
        %1110 = vmatprep.subr.bf16.mxu0 0
        %1111 = vmatpush1.bf16.msra.mxu0 0
        %1112 = vmatprep.subr.bf16.mxu0 0
        %1113 = vmatpush1.bf16.msra.mxu0 0
        %1114 = vmatprep.subr.bf16.mxu0 0
        %1115 = vmatpush1.bf16.msra.mxu0 0
        %1116 = vmatprep.subr.bf16.mxu0 0
        %1117 = vmatpush1.bf16.msra.mxu0 0
        %1118 = vmatprep.subr.bf16.mxu0 0
        %1119 = vmatpush1.bf16.msra.mxu0 0
        %1120 = vmatprep.subr.bf16.mxu0 0
        %1121 = vmatpush1.bf16.msra.mxu0 0
        %1122 = vmatprep.subr.bf16.mxu0 0
        %1123 = vmatpush1.bf16.msra.mxu0 0
        %1124 = vmatprep.subr.bf16.mxu0 0
        %1125 = vmatpush1.bf16.msra.mxu0 0
        %1126 = vmatprep.subr.bf16.mxu0 0
        %1127 = vmatpush1.bf16.msra.mxu0 0
        %1128 = vmatprep.mubr.bf16.mxu0 0
        %1129 = vmatmul.mubr.bf16.gmra.mrb[0].mxu0 %v1091
        %v1130 = vpop.f32.mrb[0].mxu0
        %v1131 = vadd.f32 0.0, %v1130
        %v1132 = vpop.f32.mrb[0].mxu0
        %v1133 = vpop.f32.mrb[0].mxu0
        %v1134 = vadd.f32 0.0, %v1133
        %v1135 = vpop.f32.mrb[0].mxu0
        %1136 = vmatprep.mubr.bf16.mxu0 0
        %1137 = vmatmul.mubr.bf16.gmra.mrb[0].mxu0 %v1094
        %v1138 = vpop.f32.mrb[0].mxu0
        %v1139 = vadd.f32 0.0, %v1138
        %v1140 = vpop.f32.mrb[0].mxu0
        %v1141 = vpop.f32.mrb[0].mxu0
        %v1142 = vadd.f32 0.0, %v1141
        %v1143 = vpop.f32.mrb[0].mxu0
        %1144 = vdwg.mxu0
        %v1145 = vadd.f32 %v1070, %v1131
        %v1146 = vadd.f32 %v1071, %v1134
        %v1147 = vadd.f32 %v1072, %v1139
        %v1148 = vadd.f32 %v1073, %v1142
        %v1149 = vld [vmem:[%s4] sm:$0x1]
        %v1151 = vlaneseq
        %v1152 = vshrl.u32 %v1151, 7
        %v1153 = vsub.s32 0, %v1152
        %v1154 = vrot.slane %v1149, %v1153
        %v1156 = vadd.f32 %v894, %v1154
        %v1157 = vadd.f32 %v895, %v1154
        %v1158 = vadd.f32 %v896, %v1154
        %v1159 = vadd.f32 %v897, %v1154
        %v1160 = vmax.f32 %v1156, 0.0
        %v1161 = vmax.f32 %v1157, 0.0
        %v1162 = vmax.f32 %v1158, 0.0
        %v1163 = vmax.f32 %v1159, 0.0
        %v1164 = vpack.c.bf16 %v1161, %v1160
        %v1165 = vpack.c.bf16 %v1163, %v1162
        %v1166 = vadd.f32 %v1145, %v1154
        %v1167 = vadd.f32 %v1146, %v1154
        %v1168 = vadd.f32 %v1147, %v1154
        %v1169 = vadd.f32 %v1148, %v1154
        %v1170 = vmax.f32 %v1166, 0.0
        %v1171 = vmax.f32 %v1167, 0.0
        %v1172 = vmax.f32 %v1168, 0.0
        %v1173 = vmax.f32 %v1169, 0.0
        %v1174 = vpack.c.bf16 %v1171, %v1170
        %v1175 = vpack.c.bf16 %v1173, %v1172
        %v1176 = vld [vmem:[%s5] sm:$0xf]
        %v1177 = vld [vmem:[%s5 + $0x4] sm:$0xf]
        %v1178 = vld [vmem:[%s5 + $0x8] sm:$0xf]
        %v1179 = vld [vmem:[%s5 + $0xc] sm:$0xf]
        %v1180 = vld [vmem:[%s5 + $0x10] sm:$0xf]
        %v1181 = vld [vmem:[%s5 + $0x14] sm:$0xf]
        %v1182 = vld [vmem:[%s5 + $0x18] sm:$0xf]
        %v1183 = vld [vmem:[%s5 + $0x1c] sm:$0xf]
        %v1186 = vunpack.c.l.b16 %v1178
        %v1187 = vunpack.c.l.b16 %v1179
        %v1188 = vpack.c.b16 %v1187, %v1186
        %vm1190 = vcmask 130048
        %v1192 = vsel %vm1190, %v1174, 0
        %v1195 = vsel %vm1190, %v1175, 0
        %1197 = vmatprep.subr.bf16.mxu0 0
        %1198 = vmatpush1.bf16.msra.mxu0 %v1188
        %1199 = vmatprep.subr.bf16.mxu0 0
        %1200 = vmatpush1.bf16.msra.mxu0 0
        %1201 = vmatprep.subr.bf16.mxu0 0
        %1202 = vmatpush1.bf16.msra.mxu0 0
        %1203 = vmatprep.subr.bf16.mxu0 0
        %1204 = vmatpush1.bf16.msra.mxu0 0
        %1205 = vmatprep.subr.bf16.mxu0 0
        %1206 = vmatpush1.bf16.msra.mxu0 0
        %1207 = vmatprep.subr.bf16.mxu0 0
        %1208 = vmatpush1.bf16.msra.mxu0 0
        %1209 = vmatprep.subr.bf16.mxu0 0
        %1210 = vmatpush1.bf16.msra.mxu0 0
        %1211 = vmatprep.subr.bf16.mxu0 0
        %1212 = vmatpush1.bf16.msra.mxu0 0
        %1213 = vmatprep.subr.bf16.mxu0 0
        %1214 = vmatpush1.bf16.msra.mxu0 0
        %1215 = vmatprep.subr.bf16.mxu0 0
        %1216 = vmatpush1.bf16.msra.mxu0 0
        %1217 = vmatprep.subr.bf16.mxu0 0
        %1218 = vmatpush1.bf16.msra.mxu0 0
        %1219 = vmatprep.subr.bf16.mxu0 0
        %1220 = vmatpush1.bf16.msra.mxu0 0
        %1221 = vmatprep.subr.bf16.mxu0 0
        %1222 = vmatpush1.bf16.msra.mxu0 0
        %1223 = vmatprep.subr.bf16.mxu0 0
        %1224 = vmatpush1.bf16.msra.mxu0 0
        %1225 = vmatprep.subr.bf16.mxu0 0
        %1226 = vmatpush1.bf16.msra.mxu0 0
        %1227 = vmatprep.subr.bf16.mxu0 0
        %1228 = vmatpush1.bf16.msra.mxu0 0
        %1229 = vmatprep.mubr.bf16.mxu0 0
        %1230 = vmatmul.mubr.bf16.gmra.mrb[0].mxu0 %v1192
        %v1231 = vpop.f32.mrb[0].mxu0
        %v1232 = vadd.f32 0.0, %v1231
        %v1233 = vpop.f32.mrb[0].mxu0
        %v1234 = vpop.f32.mrb[0].mxu0
        %v1235 = vadd.f32 0.0, %v1234
        %v1236 = vpop.f32.mrb[0].mxu0
        %1237 = vmatprep.mubr.bf16.mxu0 0
        %1238 = vmatmul.mubr.bf16.gmra.mrb[0].mxu0 %v1195
        %v1239 = vpop.f32.mrb[0].mxu0
        %v1240 = vadd.f32 0.0, %v1239
        %v1241 = vpop.f32.mrb[0].mxu0
        %v1242 = vpop.f32.mrb[0].mxu0
        %v1243 = vadd.f32 0.0, %v1242
        %v1244 = vpop.f32.mrb[0].mxu0
        %1245 = vdwg.mxu0
        %v1248 = vunpack.c.l.b16 %v1176
        %v1249 = vunpack.c.l.b16 %v1177
        %v1250 = vpack.c.b16 %v1249, %v1248
        %v1253 = vsel %vm1190, %v1164, 0
        %v1256 = vsel %vm1190, %v1165, 0
        %1258 = vmatprep.subr.bf16.mxu0 0
        %1259 = vmatpush1.bf16.msra.mxu0 %v1250
        %1260 = vmatprep.subr.bf16.mxu0 0
        %1261 = vmatpush1.bf16.msra.mxu0 0
        %1262 = vmatprep.subr.bf16.mxu0 0
        %1263 = vmatpush1.bf16.msra.mxu0 0
        %1264 = vmatprep.subr.bf16.mxu0 0
        %1265 = vmatpush1.bf16.msra.mxu0 0
        %1266 = vmatprep.subr.bf16.mxu0 0
        %1267 = vmatpush1.bf16.msra.mxu0 0
        %1268 = vmatprep.subr.bf16.mxu0 0
        %1269 = vmatpush1.bf16.msra.mxu0 0
        %1270 = vmatprep.subr.bf16.mxu0 0
        %1271 = vmatpush1.bf16.msra.mxu0 0
        %1272 = vmatprep.subr.bf16.mxu0 0
        %1273 = vmatpush1.bf16.msra.mxu0 0
        %1274 = vmatprep.subr.bf16.mxu0 0
        %1275 = vmatpush1.bf16.msra.mxu0 0
        %1276 = vmatprep.subr.bf16.mxu0 0
        %1277 = vmatpush1.bf16.msra.mxu0 0
        %1278 = vmatprep.subr.bf16.mxu0 0
        %1279 = vmatpush1.bf16.msra.mxu0 0
        %1280 = vmatprep.subr.bf16.mxu0 0
        %1281 = vmatpush1.bf16.msra.mxu0 0
        %1282 = vmatprep.subr.bf16.mxu0 0
        %1283 = vmatpush1.bf16.msra.mxu0 0
        %1284 = vmatprep.subr.bf16.mxu0 0
        %1285 = vmatpush1.bf16.msra.mxu0 0
        %1286 = vmatprep.subr.bf16.mxu0 0
        %1287 = vmatpush1.bf16.msra.mxu0 0
        %1288 = vmatprep.subr.bf16.mxu0 0
        %1289 = vmatpush1.bf16.msra.mxu0 0
        %1290 = vmatprep.mubr.bf16.mxu0 0
        %1291 = vmatmul.mubr.bf16.gmra.mrb[0].mxu0 %v1253
        %v1292 = vpop.f32.mrb[0].mxu0
        %v1293 = vadd.f32 %v1232, %v1292
        %v1294 = vpop.f32.mrb[0].mxu0
        %v1295 = vpop.f32.mrb[0].mxu0
        %v1296 = vadd.f32 %v1235, %v1295
        %v1297 = vpop.f32.mrb[0].mxu0
        %1298 = vmatprep.mubr.bf16.mxu0 0
        %1299 = vmatmul.mubr.bf16.gmra.mrb[0].mxu0 %v1256
        %v1300 = vpop.f32.mrb[0].mxu0
        %v1301 = vadd.f32 %v1240, %v1300
        %v1302 = vpop.f32.mrb[0].mxu0
        %v1303 = vpop.f32.mrb[0].mxu0
        %v1304 = vadd.f32 %v1243, %v1303
        %v1305 = vpop.f32.mrb[0].mxu0
        %1306 = vdwg.mxu0
        %v1307 = vshrl.u32 %v1164, 16
        %v1309 = vshll.u32 %v1164, 16
        %v1311 = vrot.slane %v1309, 1
        %v1312 = vor.u32 %v1307, %v1311
        %v1313 = vshll.u32 %v1165, 16
        %v1315 = vrot.slane %v1313, 1
        %v1316 = vsel %vm996, %v1312, %v1315
        %v1317 = vshrl.u32 %v1165, 16
        %v1319 = vor.u32 %v1317, %v1315
        %v1322 = vsel %vm1013, %v1319, %v1311
        %v1325 = vunpack.c.l.b16 %v1180
        %v1326 = vunpack.c.l.b16 %v1181
        %v1327 = vpack.c.b16 %v1326, %v1325
        %v1330 = vsel %vm1190, %v1316, 0
        %v1333 = vsel %vm1190, %v1322, 0
        %1335 = vmatprep.subr.bf16.mxu0 0
        %1336 = vmatpush1.bf16.msra.mxu0 %v1327
        %1337 = vmatprep.subr.bf16.mxu0 0
        %1338 = vmatpush1.bf16.msra.mxu0 0
        %1339 = vmatprep.subr.bf16.mxu0 0
        %1340 = vmatpush1.bf16.msra.mxu0 0
        %1341 = vmatprep.subr.bf16.mxu0 0
        %1342 = vmatpush1.bf16.msra.mxu0 0
        %1343 = vmatprep.subr.bf16.mxu0 0
        %1344 = vmatpush1.bf16.msra.mxu0 0
        %1345 = vmatprep.subr.bf16.mxu0 0
        %1346 = vmatpush1.bf16.msra.mxu0 0
        %1347 = vmatprep.subr.bf16.mxu0 0
        %1348 = vmatpush1.bf16.msra.mxu0 0
        %1349 = vmatprep.subr.bf16.mxu0 0
        %1350 = vmatpush1.bf16.msra.mxu0 0
        %1351 = vmatprep.subr.bf16.mxu0 0
        %1352 = vmatpush1.bf16.msra.mxu0 0
        %1353 = vmatprep.subr.bf16.mxu0 0
        %1354 = vmatpush1.bf16.msra.mxu0 0
        %1355 = vmatprep.subr.bf16.mxu0 0
        %1356 = vmatpush1.bf16.msra.mxu0 0
        %1357 = vmatprep.subr.bf16.mxu0 0
        %1358 = vmatpush1.bf16.msra.mxu0 0
        %1359 = vmatprep.subr.bf16.mxu0 0
        %1360 = vmatpush1.bf16.msra.mxu0 0
        %1361 = vmatprep.subr.bf16.mxu0 0
        %1362 = vmatpush1.bf16.msra.mxu0 0
        %1363 = vmatprep.subr.bf16.mxu0 0
        %1364 = vmatpush1.bf16.msra.mxu0 0
        %1365 = vmatprep.subr.bf16.mxu0 0
        %1366 = vmatpush1.bf16.msra.mxu0 0
        %1367 = vmatprep.mubr.bf16.mxu0 0
        %1368 = vmatmul.mubr.bf16.gmra.mrb[0].mxu0 %v1330
        %v1369 = vpop.f32.mrb[0].mxu0
        %v1370 = vadd.f32 0.0, %v1369
        %v1371 = vpop.f32.mrb[0].mxu0
        %v1372 = vpop.f32.mrb[0].mxu0
        %v1373 = vadd.f32 0.0, %v1372
        %v1374 = vpop.f32.mrb[0].mxu0
        %1375 = vmatprep.mubr.bf16.mxu0 0
        %1376 = vmatmul.mubr.bf16.gmra.mrb[0].mxu0 %v1333
        %v1377 = vpop.f32.mrb[0].mxu0
        %v1378 = vadd.f32 0.0, %v1377
        %v1379 = vpop.f32.mrb[0].mxu0
        %v1380 = vpop.f32.mrb[0].mxu0
        %v1381 = vadd.f32 0.0, %v1380
        %v1382 = vpop.f32.mrb[0].mxu0
        %1383 = vdwg.mxu0
        %v1384 = vadd.f32 %v1293, %v1370
        %v1385 = vadd.f32 %v1296, %v1373
        %v1386 = vadd.f32 %v1301, %v1378
        %v1387 = vadd.f32 %v1304, %v1381
        %v1388 = vshrl.u32 %v1174, 16
        %v1390 = vshll.u32 %v1174, 16
        %v1392 = vrot.slane %v1390, 1
        %v1393 = vor.u32 %v1388, %v1392
        %v1394 = vshll.u32 %v1175, 16
        %v1396 = vrot.slane %v1394, 1
        %v1397 = vsel %vm996, %v1393, %v1396
        %v1398 = vshrl.u32 %v1175, 16
        %v1400 = vor.u32 %v1398, %v1396
        %v1403 = vsel %vm1013, %v1400, %v1392
        %v1406 = vunpack.c.l.b16 %v1182
        %v1407 = vunpack.c.l.b16 %v1183
        %v1408 = vpack.c.b16 %v1407, %v1406
        %v1411 = vsel %vm1190, %v1397, 0
        %v1414 = vsel %vm1190, %v1403, 0
        %1416 = vmatprep.subr.bf16.mxu0 0
        %1417 = vmatpush1.bf16.msra.mxu0 %v1408
        %1418 = vmatprep.subr.bf16.mxu0 0
        %1419 = vmatpush1.bf16.msra.mxu0 0
        %1420 = vmatprep.subr.bf16.mxu0 0
        %1421 = vmatpush1.bf16.msra.mxu0 0
        %1422 = vmatprep.subr.bf16.mxu0 0
        %1423 = vmatpush1.bf16.msra.mxu0 0
        %1424 = vmatprep.subr.bf16.mxu0 0
        %1425 = vmatpush1.bf16.msra.mxu0 0
        %1426 = vmatprep.subr.bf16.mxu0 0
        %1427 = vmatpush1.bf16.msra.mxu0 0
        %1428 = vmatprep.subr.bf16.mxu0 0
        %1429 = vmatpush1.bf16.msra.mxu0 0
        %1430 = vmatprep.subr.bf16.mxu0 0
        %1431 = vmatpush1.bf16.msra.mxu0 0
        %1432 = vmatprep.subr.bf16.mxu0 0
        %1433 = vmatpush1.bf16.msra.mxu0 0
        %1434 = vmatprep.subr.bf16.mxu0 0
        %1435 = vmatpush1.bf16.msra.mxu0 0
        %1436 = vmatprep.subr.bf16.mxu0 0
        %1437 = vmatpush1.bf16.msra.mxu0 0
        %1438 = vmatprep.subr.bf16.mxu0 0
        %1439 = vmatpush1.bf16.msra.mxu0 0
        %1440 = vmatprep.subr.bf16.mxu0 0
        %1441 = vmatpush1.bf16.msra.mxu0 0
        %1442 = vmatprep.subr.bf16.mxu0 0
        %1443 = vmatpush1.bf16.msra.mxu0 0
        %1444 = vmatprep.subr.bf16.mxu0 0
        %1445 = vmatpush1.bf16.msra.mxu0 0
        %1446 = vmatprep.subr.bf16.mxu0 0
        %1447 = vmatpush1.bf16.msra.mxu0 0
        %1448 = vmatprep.mubr.bf16.mxu0 0
        %1449 = vmatmul.mubr.bf16.gmra.mrb[0].mxu0 %v1411
        %v1450 = vpop.f32.mrb[0].mxu0
        %v1451 = vadd.f32 0.0, %v1450
        %v1452 = vpop.f32.mrb[0].mxu0
        %v1453 = vpop.f32.mrb[0].mxu0
        %v1454 = vadd.f32 0.0, %v1453
        %v1455 = vpop.f32.mrb[0].mxu0
        %1456 = vmatprep.mubr.bf16.mxu0 0
        %1457 = vmatmul.mubr.bf16.gmra.mrb[0].mxu0 %v1414
        %v1458 = vpop.f32.mrb[0].mxu0
        %v1459 = vadd.f32 0.0, %v1458
        %v1460 = vpop.f32.mrb[0].mxu0
        %v1461 = vpop.f32.mrb[0].mxu0
        %v1462 = vadd.f32 0.0, %v1461
        %v1463 = vpop.f32.mrb[0].mxu0
        %1464 = vdwg.mxu0
        %v1465 = vadd.f32 %v1384, %v1451
        %v1466 = vadd.f32 %v1385, %v1454
        %v1467 = vadd.f32 %v1386, %v1459
        %v1468 = vadd.f32 %v1387, %v1462
        %v1469 = vld [vmem:[%s6] sm:$0x1]
        %v1471 = vlaneseq
        %v1472 = vshrl.u32 %v1471, 7
        %v1473 = vsub.s32 0, %v1472
        %v1474 = vrot.slane %v1469, %v1473
        %v1476 = vadd.f32 %v1465, %v1474
        %v1477 = vadd.f32 %v1466, %v1474
        %v1478 = vadd.f32 %v1467, %v1474
        %v1479 = vadd.f32 %v1468, %v1474
        %v1480 = vmax.f32 %v1476, 0.0
        %v1481 = vmax.f32 %v1477, 0.0
        %v1482 = vmax.f32 %v1478, 0.0
        %v1483 = vmax.f32 %v1479, 0.0
        %v1484 = vpack.c.bf16 %v1481, %v1480
        %v1485 = vpack.c.bf16 %v1483, %v1482
        %v1486 = vld [vmem:[%s7] sm:$0xf]
        %v1487 = vld [vmem:[%s7 + $0x4] sm:$0xf]
        %v1488 = vld [vmem:[%s7 + $0x8] sm:$0xf]
        %v1489 = vld [vmem:[%s7 + $0xc] sm:$0xf]
        %v1490 = vld [vmem:[%s8] sm:$0x1]
        %v1492 = vlaneseq
        %v1493 = vshrl.u32 %v1492, 7
        %v1494 = vsub.s32 0, %v1493
        %v1495 = vrot.slane %v1490, %v1494
        %v1501 = vunpack.c.l.b16 %v1486
        %v1502 = vunpack.c.l.b16 %v1487
        %v1503 = vunpack.c.l.b16 %v1488
        %v1504 = vunpack.c.l.b16 %v1489
        %v1505 = vpack.c.b16 %v1502, %v1501
        %v1506 = vpack.c.b16 %v1504, %v1503
        %vm1509 = vcmask 261120
        %v1511 = vsel %vm1509, %v1484, 0
        %v1514 = vsel %vm1509, %v1485, 0
        %1516 = vmatprep.subr.bf16.mxu0 0
        %1517 = vmatpush1.bf16.msra.mxu0 %v1505
        %1518 = vmatprep.subr.bf16.mxu0 0
        %1519 = vmatpush1.bf16.msra.mxu0 %v1506
        %1520 = vmatprep.subr.bf16.mxu0 0
        %1521 = vmatpush1.bf16.msra.mxu0 0
        %1522 = vmatprep.subr.bf16.mxu0 0
        %1523 = vmatpush1.bf16.msra.mxu0 0
        %1524 = vmatprep.subr.bf16.mxu0 0
        %1525 = vmatpush1.bf16.msra.mxu0 0
        %1526 = vmatprep.subr.bf16.mxu0 0
        %1527 = vmatpush1.bf16.msra.mxu0 0
        %1528 = vmatprep.subr.bf16.mxu0 0
        %1529 = vmatpush1.bf16.msra.mxu0 0
        %1530 = vmatprep.subr.bf16.mxu0 0
        %1531 = vmatpush1.bf16.msra.mxu0 0
        %1532 = vmatprep.subr.bf16.mxu0 0
        %1533 = vmatpush1.bf16.msra.mxu0 0
        %1534 = vmatprep.subr.bf16.mxu0 0
        %1535 = vmatpush1.bf16.msra.mxu0 0
        %1536 = vmatprep.subr.bf16.mxu0 0
        %1537 = vmatpush1.bf16.msra.mxu0 0
        %1538 = vmatprep.subr.bf16.mxu0 0
        %1539 = vmatpush1.bf16.msra.mxu0 0
        %1540 = vmatprep.subr.bf16.mxu0 0
        %1541 = vmatpush1.bf16.msra.mxu0 0
        %1542 = vmatprep.subr.bf16.mxu0 0
        %1543 = vmatpush1.bf16.msra.mxu0 0
        %1544 = vmatprep.subr.bf16.mxu0 0
        %1545 = vmatpush1.bf16.msra.mxu0 0
        %1546 = vmatprep.subr.bf16.mxu0 0
        %1547 = vmatpush1.bf16.msra.mxu0 0
        %1548 = vmatprep.mubr.bf16.mxu0 0
        %1549 = vmatmul.mubr.bf16.gmra.mrb[0].mxu0 %v1511
        %v1550 = vpop.f32.mrb[0].mxu0
        %v1551 = vadd.f32 %v1495, %v1550
        %v1552 = vpop.f32.mrb[0].mxu0
        %v1553 = vpop.f32.mrb[0].mxu0
        %v1554 = vadd.f32 %v1495, %v1553
        %v1555 = vpop.f32.mrb[0].mxu0
        %1556 = vmatprep.mubr.bf16.mxu0 0
        %1557 = vmatmul.mubr.bf16.gmra.mrb[0].mxu0 %v1514
        %v1558 = vpop.f32.mrb[0].mxu0
        %v1559 = vadd.f32 %v1495, %v1558
        %v1560 = vpop.f32.mrb[0].mxu0
        %v1561 = vpop.f32.mrb[0].mxu0
        %v1562 = vadd.f32 %v1495, %v1561
        %v1563 = vpop.f32.mrb[0].mxu0
        %1564 = vdwg.mxu0
        %1565 = vst.msk [vmem:[%s435] sm:$0xff] %vm1190, %v1551
        %1566 = vst.msk [vmem:[%s435 + $0x8] sm:$0xff] %vm1190, %v1554
        %1567 = vst.msk [vmem:[%s435 + $0x10] sm:$0xff] %vm1190, %v1559
        %1568 = vst.msk [vmem:[%s435 + $0x18] sm:$0xff] %vm1190, %v1562
        %s1569 = smul.u32 4, %s20
        %p1570 = scmp.lt.s32.totalorder %s1569, 7
        %s1571 = scalar_select %p1570, %s1569, 7
        %s1572 = smul.addr %s1571, 8
        %s1573 = scalar_lea.vmem %s9, %s1572
        // Predicated region
        $region98: #{tpu_custom_call.1} parent=92 // pred_check
          %p1574 = pneg %p232
        $region99: #{tpu_custom_call.1} parent=92 // pred_check_branch
          %1576 = sbr.rel (%p1574) target = $region101
        $region100: #{tpu_custom_call.1} parent=92 // pred_region
          %s1577 = smul.u32 4, %s20
        $region101: #{tpu_custom_call.1} parent=92 // pred_fallthru
          _
      $region93: #{tpu_custom_call.1} parent=5 // pred_fallthru
        _
      %p1578 = scmp.le.s32.totalorder 2, %s15
      // Predicated region
      $region102: #{tpu_custom_call.1} parent=5 // pred_check
        %p1579 = pneg %p1578
      $region103: #{tpu_custom_call.1} parent=5 // pred_check_branch
        %1581 = sbr.rel (%p1579) target = $region105
      $region104: #{tpu_custom_call.1} parent=5 // pred_region
        %s1582 = ssub.s32 %s15, 2
        // Predicated region
        $region106: #{tpu_custom_call.1} parent=104 // pred_check
          %p1583 = pneg %p238
        $region107: #{tpu_custom_call.1} parent=104 // pred_check_branch
          %1585 = sbr.rel (%p1583) target = $region109
        $region108: #{tpu_custom_call.1} parent=104 // pred_region
          %s1586 = smul.u32 4, %s21
          %p1587 = scmp.lt.s32.totalorder %s1586, 7
          %s1588 = scalar_select %p1587, %s1586, 7
          %s1589 = smul.addr %s1588, 8
          %s1590 = scalar_lea.vmem %s9, %s1589
        $region109: #{tpu_custom_call.1} parent=104 // pred_fallthru
          _
      $region105: #{tpu_custom_call.1} parent=5 // pred_fallthru
        _
    $region6: #{tpu_custom_call.1} parent=1 // loop_footer
      %s19 = sadd.s32 1, %s15
    $region7: #{tpu_custom_call.1} parent=1 // loop_footer_branch
      %14 = sbr.rel target = $region3
    $region8: #{tpu_custom_call.1} parent=1 // loop_exit
      _

</llo_original>
